<compile_context>
chip_gen: v6e
topology: v6e:2x2x1
jax: 0.10.0
libtpu: 0.0.40
codegen_flags: <defaults>
</compile_context>

<pallas_src>
import jax
import jax.numpy as jnp
import numpy as np
from jax.experimental import pallas as pl
from jax.experimental.pallas import tpu as pltpu

EPS = 1e-5
LANE = 128
H1, H2, OUT = 500, 100, 2
H1_PAD, H2_PAD, OUT_PAD = 512, 128, 128
MAX_BATCH_TILE = 1024  # rows per grid step; footprint << 32 MiB scoped VMEM


def _round_up(n, m):
    return ((n + m - 1) // m) * m


def _pick_tiling(b):
    """Batch tiling: tb multiple of 16 (bf16 packing), small padding waste,
    even tile count (when >1) so stats passes can split across two TCs."""
    b16 = _round_up(b, 16)
    n_tiles = -(-b16 // MAX_BATCH_TILE)
    if n_tiles > 1 and n_tiles % 2:
        n_tiles += 1
    tb = _round_up(-(-b16 // n_tiles), 16)
    b_pad = n_tiles * tb
    n_split = 2 if n_tiles % 2 == 0 else 1
    n_inner = n_tiles // n_split
    return tb, b_pad, n_split, n_inner


# ---------------------------------------------------------------------------
# Pass 0: per-feature sum / sum-of-squares of x, per-core partial stats.
# Padded batch rows of x are exactly zero, so no masking is needed.
# ---------------------------------------------------------------------------
def _col_stats(x_pad, tb, n_split, n_inner):
    b_pad, d = x_pad.shape

    def kernel(x_ref, sum_ref, sq_ref):
        i = pl.program_id(1)

        @pl.when(i == 0)
        def _():
            sum_ref[...] = jnp.zeros_like(sum_ref)
            sq_ref[...] = jnp.zeros_like(sq_ref)

        x = x_ref[...]
        sum_ref[...] += jnp.sum(x, axis=0, keepdims=True)[None]
        sq_ref[...] += jnp.sum(x * x, axis=0, keepdims=True)[None]

    s, q = pl.pallas_call(
        kernel,
        out_shape=(jax.ShapeDtypeStruct((n_split, 1, d), jnp.float32),
                   jax.ShapeDtypeStruct((n_split, 1, d), jnp.float32)),
        grid=(n_split, n_inner),
        in_specs=[pl.BlockSpec((tb, d), lambda c, i: (c * n_inner + i, 0))],
        out_specs=(pl.BlockSpec((1, 1, d), lambda c, i: (c, 0, 0)),
                   pl.BlockSpec((1, 1, d), lambda c, i: (c, 0, 0))),
        compiler_params=pltpu.CompilerParams(
            # outer axis: per-core partial stats (megacore); inner: accumulator
            dimension_semantics=("parallel", "arbitrary")),
        cost_estimate=pl.CostEstimate(
            flops=3 * b_pad * d, transcendentals=0,
            bytes_accessed=b_pad * d * 4 + 2 * n_split * d * 4),
    )(x_pad)
    return s.sum(axis=0), q.sum(axis=0)  # (1, d) each


def _bn_stats_to_affine(col_sum, col_sq, gamma, beta, n):
    """Fold BN(mean, biased var, gamma, beta) into per-feature scale/shift.

    NOTE: E[x^2]-E[x]^2 in f32 can cancel for features with |mean| >> std;
    fine for normalized/tabular-scale data, revisit for raw large-mean inputs.
    """
    inv_n = jnp.float32(1.0 / n)
    mean = col_sum * inv_n
    var = jnp.maximum(col_sq * inv_n - mean * mean, 0.0)  # biased variance
    inv_std = jax.lax.rsqrt(var + EPS)
    scale = gamma * inv_std
    shift = beta - mean * scale
    return scale, shift


def _fold_bn_into_linear(scale, shift, w, b):
    """(x*scale + shift) @ W + b  ==  x @ (scale^T * W) + (shift @ W + b)."""
    w_f = (scale.reshape(-1, 1) * w).astype(jnp.bfloat16)
    b_f = shift @ w + b
    return w_f, b_f


# ---------------------------------------------------------------------------
# Passes 1 & 2: relu(x @ W' + b') with per-core column stats of the f32
# activations (for the next BatchNorm); activations stored in bf16.
# ---------------------------------------------------------------------------
def _linear_relu_stats(x_pad, w, b, n_valid, tb, n_split, n_inner):
    b_pad, d_in = x_pad.shape
    d_out = w.shape[1]
    has_pad_rows = b_pad != n_valid

    def kernel(x_ref, w_ref, b_ref, h_ref, sum_ref, sq_ref):
        c = pl.program_id(0)
        i = pl.program_id(1)

        @pl.when(i == 0)
        def _():
            sum_ref[...] = jnp.zeros_like(sum_ref)
            sq_ref[...] = jnp.zeros_like(sq_ref)

        xb = x_ref[...].astype(jnp.bfloat16)  # no-op when x is already bf16
        h = jnp.dot(xb, w_ref[...],
                    preferred_element_type=jnp.float32) + b_ref[...]
        h = jnp.maximum(h, 0.0)
        h_ref[...] = h.astype(h_ref.dtype)  # bf16 store

        def accum(hv):
            sum_ref[...] += jnp.sum(hv, axis=0, keepdims=True)[None]
            sq_ref[...] += jnp.sum(hv * hv, axis=0, keepdims=True)[None]

        if has_pad_rows:
            t = c * n_inner + i
            needs_mask = (t + 1) * tb > n_valid  # only tiles with padded rows

            @pl.when(needs_mask)
            def _():
                rows = t * tb + jax.lax.broadcasted_iota(jnp.int32, h.shape, 0)
                accum(jnp.where(rows < n_valid, h, 0.0))

            @pl.when(jnp.logical_not(needs_mask))
            def _():
                accum(h)
        else:
            accum(h)

    in_bytes = x_pad.dtype.itemsize
    h, s, q = pl.pallas_call(
        kernel,
        out_shape=(jax.ShapeDtypeStruct((b_pad, d_out), jnp.bfloat16),
                   jax.ShapeDtypeStruct((n_split, 1, d_out), jnp.float32),
                   jax.ShapeDtypeStruct((n_split, 1, d_out), jnp.float32)),
        grid=(n_split, n_inner),
        in_specs=[
            pl.BlockSpec((tb, d_in), lambda c, i: (c * n_inner + i, 0)),  # stream
            pl.BlockSpec((d_in, d_out), lambda c, i: (0, 0)),  # folded W: resident
            pl.BlockSpec((1, d_out), lambda c, i: (0, 0)),     # folded b: resident
        ],
        out_specs=(pl.BlockSpec((tb, d_out), lambda c, i: (c * n_inner + i, 0)),
                   pl.BlockSpec((1, 1, d_out), lambda c, i: (c, 0, 0)),
                   pl.BlockSpec((1, 1, d_out), lambda c, i: (c, 0, 0))),
        compiler_params=pltpu.CompilerParams(
            dimension_semantics=("parallel", "arbitrary")),
        cost_estimate=pl.CostEstimate(
            flops=2 * b_pad * d_in * d_out + 6 * b_pad * d_out,
            transcendentals=0,
            bytes_accessed=(b_pad * d_in * in_bytes + b_pad * d_out * 2
                            + d_in * d_out * 2 + d_out * 4
                            + 2 * n_split * d_out * 4)),
    )(x_pad, w, b)
    return h, s.sum(axis=0), q.sum(axis=0)


# ---------------------------------------------------------------------------
# Pass 3: x @ W' + b' -> lane-dense (B,128) f32 logits (sigmoid in wrapper).
# ---------------------------------------------------------------------------
def _linear_logits(x_pad, w, b, tb):
    b_pad, d_in = x_pad.shape
    d_out = w.shape[1]

    def kernel(x_ref, w_ref, b_ref, o_ref):
        xb = x_ref[...].astype(jnp.bfloat16)
        o_ref[...] = (jnp.dot(xb, w_ref[...], preferred_element_type=jnp.float32)
                      + b_ref[...])

    return pl.pallas_call(
        kernel,
        out_shape=jax.ShapeDtypeStruct((b_pad, d_out), jnp.float32),
        grid=(b_pad // tb,),
        in_specs=[pl.BlockSpec((tb, d_in), lambda i: (i, 0)),
                  pl.BlockSpec((d_in, d_out), lambda i: (0, 0)),
                  pl.BlockSpec((1, d_out), lambda i: (0, 0))],
        out_specs=pl.BlockSpec((tb, d_out), lambda i: (i, 0)),
        compiler_params=pltpu.CompilerParams(
            dimension_semantics=("parallel",)),  # shards across TCs on v7x
        cost_estimate=pl.CostEstimate(
            flops=2 * b_pad * d_in * d_out, transcendentals=0,
            bytes_accessed=(b_pad * d_in * 2 + b_pad * d_out * 4
                            + d_in * d_out * 2 + d_out * 4)),
    )(x_pad, w, b)


# ---------------------------------------------------------------------------
# Full forward pass (training-mode BatchNorm semantics).
# ---------------------------------------------------------------------------
def tabular_model_forward(x, params):
    """x: (B, D) f32.  Returns (B, 2) f32 == tabularModel(x) (training mode)."""
    b, d = x.shape
    d_pad = params["w1"].shape[0]
    assert d <= d_pad

    tb, b_pad, n_split, n_inner = _pick_tiling(b)
    x_pad = jnp.zeros((b_pad, d_pad), jnp.float32).at[:b, :d].set(x)

    # TODO(synk): for batches that fit VMEM whole, the four pallas_calls could
    # be fused into one (phase, tile) grid keeping x/h1/h2 VMEM-resident.

    # bn_in stats -> fold into lin1
    s0, q0 = _col_stats(x_pad, tb, n_split, n_inner)
    sc0, sh0 = _bn_stats_to_affine(s0, q0, params["bn_in_w"], params["bn_in_b"], b)
    w1f, b1f = _fold_bn_into_linear(sc0, sh0, params["w1"], params["b1"])

    # relu(lin1(bn_in(x))) + h1 stats; h1 stored bf16
    h1, s1, q1 = _linear_relu_stats(x_pad, w1f, b1f, b, tb, n_split, n_inner)
    sc1, sh1 = _bn_stats_to_affine(s1, q1, params["bn1_w"], params["bn1_b"], b)
    w2f, b2f = _fold_bn_into_linear(sc1, sh1, params["w2"], params["b2"])

    # relu(lin2(bn1(h1))) + h2 stats; h2 stored bf16
    h2, s2, q2 = _linear_relu_stats(h1, w2f, b2f, b, tb, n_split, n_inner)
    sc2, sh2 = _bn_stats_to_affine(s2, q2, params["bn2_w"], params["bn2_b"], b)
    w3f, b3f = _fold_bn_into_linear(sc2, sh2, params["w3"], params["b3"])

    # lin3(bn2(h2)); sigmoid only on the real (B, 2) slice
    logits = _linear_logits(h2, w3f, b3f, tb)
    return jax.nn.sigmoid(logits[:b, :OUT])


# ---------------------------------------------------------------------------
# Parameters (padded to lane tiles; f32 master weights, folded->bf16 per pass).
# ---------------------------------------------------------------------------
def init_params(key, input_size):
    """Parameters matching the PyTorch module, padded to TPU lane tiles.

    Linear weights are stored transposed as (in_features, out_features) in f32
    (master copies; the BN fold re-casts them to bf16 every forward).  Padding:
    weights/biases -> 0, BN gamma -> 1, beta -> 0, so padded features stay
    exactly 0 through every layer.
    """
    d_pad = _round_up(max(input_size, LANE), LANE)
    keys = jax.random.split(key, 6)

    def lin_init(kw, kb, fan_in, fan_out, in_pad, out_pad):
        bound = 1.0 / np.sqrt(fan_in)
        w = jax.random.uniform(kw, (fan_in, fan_out), jnp.float32, -bound, bound)
        b = jax.random.uniform(kb, (fan_out,), jnp.float32, -bound, bound)
        w_pad = jnp.zeros((in_pad, out_pad), jnp.float32).at[:fan_in, :fan_out].set(w)
        b_pad = jnp.zeros((1, out_pad), jnp.float32).at[0, :fan_out].set(b)
        return w_pad, b_pad

    w1, b1 = lin_init(keys[0], keys[1], input_size, H1, d_pad, H1_PAD)
    w2, b2 = lin_init(keys[2], keys[3], H1, H2, H1_PAD, H2_PAD)
    w3, b3 = lin_init(keys[4], keys[5], H2, OUT, H2_PAD, OUT_PAD)

    return dict(
        w1=w1, b1=b1, w2=w2, b2=b2, w3=w3, b3=b3,
        # BatchNorm1d default init: weight=1, bias=0 (padding also 1 / 0).
        bn_in_w=jnp.ones((1, d_pad), jnp.float32),
        bn_in_b=jnp.zeros((1, d_pad), jnp.float32),
        bn1_w=jnp.ones((1, H1_PAD), jnp.float32),
        bn1_b=jnp.zeros((1, H1_PAD), jnp.float32),
        bn2_w=jnp.ones((1, H2_PAD), jnp.float32),
        bn2_b=jnp.zeros((1, H2_PAD), jnp.float32),
    )


# ---------------------------------------------------------------------------
# Pure-JAX reference (unpadded), mirroring the kernel numerics: training-mode
# BN folded into the next linear, bf16 matmuls with f32 accumulation.
# ---------------------------------------------------------------------------
def reference_forward(x, p, input_size):
    d = input_size
    n = x.shape[0]
    w1, b1 = p["w1"][:d, :H1], p["b1"][:, :H1]
    w2, b2 = p["w2"][:H1, :H2], p["b2"][:, :H2]
    w3, b3 = p["w3"][:H2, :OUT], p["b3"][:, :OUT]

    def fold(h, g, be, w, b):
        s = jnp.sum(h, axis=0, keepdims=True)
        q = jnp.sum(h * h, axis=0, keepdims=True)
        scale, shift = _bn_stats_to_affine(s, q, g, be, n)
        return _fold_bn_into_linear(scale, shift, w, b)

    def mm(a, wf, bf):
        return jnp.dot(a.astype(jnp.bfloat16), wf,
                       preferred_element_type=jnp.float32) + bf

    w1f, b1f = fold(x, p["bn_in_w"][:, :d], p["bn_in_b"][:, :d], w1, b1)
    h1 = jnp.maximum(mm(x, w1f, b1f), 0.0)
    w2f, b2f = fold(h1, p["bn1_w"][:, :H1], p["bn1_b"][:, :H1], w2, b2)
    h2 = jnp.maximum(mm(h1, w2f, b2f), 0.0)
    w3f, b3f = fold(h2, p["bn2_w"][:, :H2], p["bn2_b"][:, :H2], w3, b3)
    return jax.nn.sigmoid(mm(h2, w3f, b3f))


if __name__ == "__main__":
    key = jax.random.PRNGKey(0)
    k_x, k_p = jax.random.split(key)

    batch = 8
    input_size = 32
    x = jax.random.normal(k_x, (batch, input_size), jnp.float32)
    params = init_params(k_p, input_size)

    fwd = jax.jit(tabular_model_forward)
    out = jax.block_until_ready(fwd(x, params))

    ref = jax.block_until_ready(reference_forward(x, params, input_size))
    np.testing.assert_allclose(np.asarray(out), np.asarray(ref),
                               rtol=5e-3, atol=5e-3)
    assert out.shape == (batch, 2)

    print("KERNEL_OK")
</pallas_src>

<mosaic_0001>
module attributes {stable_mosaic.version = 11 : i64} {
  func.func @kernel(%arg0: i32, %arg1: i32, %arg2: memref<16x128xf32, #tpu.memory_space<vmem>>, %arg3: memref<1x1x128xf32, #tpu.memory_space<vmem>>, %arg4: memref<1x1x128xf32, #tpu.memory_space<vmem>>) attributes {dimension_semantics = [#tpu.dimension_semantics<parallel>, #tpu.dimension_semantics<arbitrary>], iteration_bounds = array<i64: 1, 1>, scalar_prefetch = 0 : i64, scratch_operands = 0 : i64, tpu.core_type = #tpu.core_type<tc>, window_params = [{transform_indices = @transform_0, window_bounds = array<i64: 16, 128>}, {transform_indices = @transform_1, window_bounds = array<i64: 1, 1, 128>}, {transform_indices = @transform_2, window_bounds = array<i64: 1, 1, 128>}]} {
    %c0_i32 = arith.constant 0 : i32
    %0 = arith.cmpi eq, %arg1, %c0_i32 : i32
    %1 = arith.extui %0 : i1 to i32
    %c0_i32_0 = arith.constant 0 : i32
    %2 = arith.cmpi ne, %1, %c0_i32_0 : i32
    scf.if %2 {
      %cst_15 = arith.constant 0.000000e+00 : f32
      %17 = vector.broadcast %cst_15 : f32 to vector<1x1x128xf32>
      %c0_16 = arith.constant 0 : index
      %c0_17 = arith.constant 0 : index
      %c0_18 = arith.constant 0 : index
      %18 = vector.load %arg3[%c0_16, %c0_17, %c0_18] : memref<1x1x128xf32, #tpu.memory_space<vmem>>, vector<1x1x128xf32>
      tpu.vector_store %arg3[%c0_16, %c0_17, %c0_18], %17 {strides = array<i32>} : memref<1x1x128xf32, #tpu.memory_space<vmem>>, vector<1x1x128xf32>,
      %cst_19 = arith.constant 0.000000e+00 : f32
      %19 = vector.broadcast %cst_19 : f32 to vector<1x1x128xf32>
      %c0_20 = arith.constant 0 : index
      %c0_21 = arith.constant 0 : index
      %c0_22 = arith.constant 0 : index
      %20 = vector.load %arg4[%c0_20, %c0_21, %c0_22] : memref<1x1x128xf32, #tpu.memory_space<vmem>>, vector<1x1x128xf32>
      tpu.vector_store %arg4[%c0_20, %c0_21, %c0_22], %19 {strides = array<i32>} : memref<1x1x128xf32, #tpu.memory_space<vmem>>, vector<1x1x128xf32>,
    } else {
    }
    %c0 = arith.constant 0 : index
    %c0_1 = arith.constant 0 : index
    %3 = vector.load %arg2[%c0, %c0_1] : memref<16x128xf32, #tpu.memory_space<vmem>>, vector<16x128xf32>
    %c0_2 = arith.constant 0 : index
    %c0_3 = arith.constant 0 : index
    %c0_4 = arith.constant 0 : index
    %4 = vector.load %arg3[%c0_2, %c0_3, %c0_4] : memref<1x1x128xf32, #tpu.memory_space<vmem>>, vector<1x1x128xf32>
    %cst = arith.constant dense<0.000000e+00> : vector<128xf32>
    %5 = vector.multi_reduction <add>, %3, %cst [0] : vector<16x128xf32> to vector<128xf32>
    %6 = vector.shape_cast %5 : vector<128xf32> to vector<1x128xf32>
    %7 = vector.shape_cast %6 : vector<1x128xf32> to vector<1x1x128xf32>
    %8 = arith.addf %4, %7 : vector<1x1x128xf32>
    %c0_5 = arith.constant 0 : index
    %c0_6 = arith.constant 0 : index
    %c0_7 = arith.constant 0 : index
    %9 = vector.load %arg3[%c0_5, %c0_6, %c0_7] : memref<1x1x128xf32, #tpu.memory_space<vmem>>, vector<1x1x128xf32>
    tpu.vector_store %arg3[%c0_5, %c0_6, %c0_7], %8 {strides = array<i32>} : memref<1x1x128xf32, #tpu.memory_space<vmem>>, vector<1x1x128xf32>,
    %c0_8 = arith.constant 0 : index
    %c0_9 = arith.constant 0 : index
    %c0_10 = arith.constant 0 : index
    %10 = vector.load %arg4[%c0_8, %c0_9, %c0_10] : memref<1x1x128xf32, #tpu.memory_space<vmem>>, vector<1x1x128xf32>
    %11 = arith.mulf %3, %3 : vector<16x128xf32>
    %cst_11 = arith.constant dense<0.000000e+00> : vector<128xf32>
    %12 = vector.multi_reduction <add>, %11, %cst_11 [0] : vector<16x128xf32> to vector<128xf32>
    %13 = vector.shape_cast %12 : vector<128xf32> to vector<1x128xf32>
    %14 = vector.shape_cast %13 : vector<1x128xf32> to vector<1x1x128xf32>
    %15 = arith.addf %10, %14 : vector<1x1x128xf32>
    %c0_12 = arith.constant 0 : index
    %c0_13 = arith.constant 0 : index
    %c0_14 = arith.constant 0 : index
    %16 = vector.load %arg4[%c0_12, %c0_13, %c0_14] : memref<1x1x128xf32, #tpu.memory_space<vmem>>, vector<1x1x128xf32>
    tpu.vector_store %arg4[%c0_12, %c0_13, %c0_14], %15 {strides = array<i32>} : memref<1x1x128xf32, #tpu.memory_space<vmem>>, vector<1x1x128xf32>,
    return
  }
  func.func @transform_0(%arg0: i32, %arg1: i32) -> (i32, i32) {
    %c1_i32 = arith.constant 1 : i32
    %0 = arith.muli %arg0, %c1_i32 : i32
    %1 = arith.addi %0, %arg1 : i32
    %c0_i32 = arith.constant 0 : i32
    %c0_i32_0 = arith.constant 0 : i32
    return %1, %c0_i32 : i32, i32
  }
  func.func @transform_1(%arg0: i32, %arg1: i32) -> (i32, i32, i32) {
    %c0_i32 = arith.constant 0 : i32
    %c0_i32_0 = arith.constant 0 : i32
    %c0_i32_1 = arith.constant 0 : i32
    return %arg0, %c0_i32, %c0_i32_0 : i32, i32, i32
  }
  func.func @transform_2(%arg0: i32, %arg1: i32) -> (i32, i32, i32) {
    %c0_i32 = arith.constant 0 : i32
    %c0_i32_0 = arith.constant 0 : i32
    %c0_i32_1 = arith.constant 0 : i32
    return %arg0, %c0_i32, %c0_i32_0 : i32, i32, i32
  }
}

module attributes {stable_mosaic.version = 11 : i64} {
  func.func @kernel(%arg0: i32, %arg1: i32, %arg2: memref<16x128xf32, #tpu.memory_space<vmem>>, %arg3: memref<128x512xbf16, #tpu.memory_space<vmem>>, %arg4: memref<1x512xf32, #tpu.memory_space<vmem>>, %arg5: memref<16x512xbf16, #tpu.memory_space<vmem>>, %arg6: memref<1x1x512xf32, #tpu.memory_space<vmem>>, %arg7: memref<1x1x512xf32, #tpu.memory_space<vmem>>) attributes {dimension_semantics = [#tpu.dimension_semantics<parallel>, #tpu.dimension_semantics<arbitrary>], iteration_bounds = array<i64: 1, 1>, scalar_prefetch = 0 : i64, scratch_operands = 0 : i64, tpu.core_type = #tpu.core_type<tc>, window_params = [{transform_indices = @transform_0, window_bounds = array<i64: 16, 128>}, {pipeline_mode = #tpu.pipeline_mode<synchronous>, transform_indices = @transform_1, window_bounds = array<i64: 128, 512>}, {pipeline_mode = #tpu.pipeline_mode<synchronous>, transform_indices = @transform_2, window_bounds = array<i64: 1, 512>}, {transform_indices = @transform_3, window_bounds = array<i64: 16, 512>}, {transform_indices = @transform_4, window_bounds = array<i64: 1, 1, 512>}, {transform_indices = @transform_5, window_bounds = array<i64: 1, 1, 512>}]} {
    %c0_i32 = arith.constant 0 : i32
    %0 = arith.cmpi eq, %arg1, %c0_i32 : i32
    %1 = arith.extui %0 : i1 to i32
    %c0_i32_0 = arith.constant 0 : i32
    %2 = arith.cmpi ne, %1, %c0_i32_0 : i32
    scf.if %2 {
      %cst_12 = arith.constant 0.000000e+00 : f32
      %24 = vector.broadcast %cst_12 : f32 to vector<1x1x512xf32>
      %c0_13 = arith.constant 0 : index
      %c0_14 = arith.constant 0 : index
      %c0_15 = arith.constant 0 : index
      %25 = vector.load %arg6[%c0_13, %c0_14, %c0_15] : memref<1x1x512xf32, #tpu.memory_space<vmem>>, vector<1x1x512xf32>
      tpu.vector_store %arg6[%c0_13, %c0_14, %c0_15], %24 {strides = array<i32>} : memref<1x1x512xf32, #tpu.memory_space<vmem>>, vector<1x1x512xf32>,
      %cst_16 = arith.constant 0.000000e+00 : f32
      %26 = vector.broadcast %cst_16 : f32 to vector<1x1x512xf32>
      %c0_17 = arith.constant 0 : index
      %c0_18 = arith.constant 0 : index
      %c0_19 = arith.constant 0 : index
      %27 = vector.load %arg7[%c0_17, %c0_18, %c0_19] : memref<1x1x512xf32, #tpu.memory_space<vmem>>, vector<1x1x512xf32>
      tpu.vector_store %arg7[%c0_17, %c0_18, %c0_19], %26 {strides = array<i32>} : memref<1x1x512xf32, #tpu.memory_space<vmem>>, vector<1x1x512xf32>,
    } else {
    }
    %c0 = arith.constant 0 : index
    %c0_1 = arith.constant 0 : index
    %3 = vector.load %arg2[%c0, %c0_1] : memref<16x128xf32, #tpu.memory_space<vmem>>, vector<16x128xf32>
    %4 = arith.truncf %3 : vector<16x128xf32> to vector<16x128xbf16>
    %c0_2 = arith.constant 0 : index
    %c0_3 = arith.constant 0 : index
    %5 = vector.load %arg3[%c0_2, %c0_3] : memref<128x512xbf16, #tpu.memory_space<vmem>>, vector<128x512xbf16>
    %cst = arith.constant dense<0.000000e+00> : vector<16x512xf32>
    %6 = tpu.matmul %4, %5, %cst {dimension_numbers = #tpu.dot_dimension_numbers<[1], [0], [0], [1], [0, 0, 1, 1], [], []>} : vector<16x128xbf16>, vector<128x512xbf16>, vector<16x512xf32> -> vector<16x512xf32>
    %c0_4 = arith.constant 0 : index
    %c0_5 = arith.constant 0 : index
    %7 = vector.load %arg4[%c0_4, %c0_5] : memref<1x512xf32, #tpu.memory_space<vmem>>, vector<1x512xf32>
    %8 = vector.broadcast %7 : vector<1x512xf32> to vector<16x512xf32>
    %9 = arith.addf %6, %8 : vector<16x512xf32>
    %cst_6 = arith.constant 0.000000e+00 : f32
    %10 = vector.broadcast %cst_6 : f32 to vector<16x512xf32>
    %11 = arith.maximumf %9, %10 : vector<16x512xf32>
    %12 = arith.truncf %11 : vector<16x512xf32> to vector<16x512xbf16>
    %c0_7 = arith.constant 0 : index
    %c0_8 = arith.constant 0 : index
    %13 = vector.load %arg5[%c0_7, %c0_8] : memref<16x512xbf16, #tpu.memory_space<vmem>>, vector<16x512xbf16>
    tpu.vector_store %arg5[%c0_7, %c0_8], %12 {strides = array<i32>} : memref<16x512xbf16, #tpu.memory_space<vmem>>, vector<16x512xbf16>,
    %c1_i32 = arith.constant 1 : i32
    %14 = arith.muli %arg0, %c1_i32 : i32
    %15 = arith.addi %14, %arg1 : i32
    %c1_i32_9 = arith.constant 1 : i32
    %16 = arith.addi %15, %c1_i32_9 : i32
    %c16_i32 = arith.constant 16 : i32
    %17 = arith.muli %16, %c16_i32 : i32
    %c8_i32 = arith.constant 8 : i32
    %18 = arith.cmpi sgt, %17, %c8_i32 : i32
    %19 = arith.extui %18 : i1 to i32
    %c0_i32_10 = arith.constant 0 : i32
    %20 = arith.cmpi ne, %19, %c0_i32_10 : i32
    scf.if %20 {
      %c16_i32_12 = arith.constant 16 : i32
      %24 = arith.muli %15, %c16_i32_12 : i32
      %25 = tpu.iota {dimensions = array<i32: 0>} : vector<16x512xi32>
      %26 = vector.broadcast %24 : i32 to vector<16x512xi32>
      %27 = arith.addi %26, %25 : vector<16x512xi32>
      %c8_i32_13 = arith.constant 8 : i32
      %28 = vector.broadcast %c8_i32_13 : i32 to vector<16x512xi32>
      %29 = arith.cmpi slt, %27, %28 : vector<16x512xi32>
      %cst_14 = arith.constant 0.000000e+00 : f32
      %30 = vector.broadcast %cst_14 : f32 to vector<16x512xf32>
      %31 = arith.select %29, %11, %30 : vector<16x512xi1>, vector<16x512xf32>
      %c0_15 = arith.constant 0 : index
      %c0_16 = arith.constant 0 : index
      %c0_17 = arith.constant 0 : index
      %32 = vector.load %arg6[%c0_15, %c0_16, %c0_17] : memref<1x1x512xf32, #tpu.memory_space<vmem>>, vector<1x1x512xf32>
      %cst_18 = arith.constant dense<0.000000e+00> : vector<512xf32>
      %33 = vector.multi_reduction <add>, %31, %cst_18 [0] : vector<16x512xf32> to vector<512xf32>
      %34 = vector.shape_cast %33 : vector<512xf32> to vector<1x512xf32>
      %35 = vector.shape_cast %34 : vector<1x512xf32> to vector<1x1x512xf32>
      %36 = arith.addf %32, %35 : vector<1x1x512xf32>
      %c0_19 = arith.constant 0 : index
      %c0_20 = arith.constant 0 : index
      %c0_21 = arith.constant 0 : index
      %37 = vector.load %arg6[%c0_19, %c0_20, %c0_21] : memref<1x1x512xf32, #tpu.memory_space<vmem>>, vector<1x1x512xf32>
      tpu.vector_store %arg6[%c0_19, %c0_20, %c0_21], %36 {strides = array<i32>} : memref<1x1x512xf32, #tpu.memory_space<vmem>>, vector<1x1x512xf32>,
      %c0_22 = arith.constant 0 : index
      %c0_23 = arith.constant 0 : index
      %c0_24 = arith.constant 0 : index
      %38 = vector.load %arg7[%c0_22, %c0_23, %c0_24] : memref<1x1x512xf32, #tpu.memory_space<vmem>>, vector<1x1x512xf32>
      %39 = arith.mulf %31, %31 : vector<16x512xf32>
      %cst_25 = arith.constant dense<0.000000e+00> : vector<512xf32>
      %40 = vector.multi_reduction <add>, %39, %cst_25 [0] : vector<16x512xf32> to vector<512xf32>
      %41 = vector.shape_cast %40 : vector<512xf32> to vector<1x512xf32>
      %42 = vector.shape_cast %41 : vector<1x512xf32> to vector<1x1x512xf32>
      %43 = arith.addf %38, %42 : vector<1x1x512xf32>
      %c0_26 = arith.constant 0 : index
      %c0_27 = arith.constant 0 : index
      %c0_28 = arith.constant 0 : index
      %44 = vector.load %arg7[%c0_26, %c0_27, %c0_28] : memref<1x1x512xf32, #tpu.memory_space<vmem>>, vector<1x1x512xf32>
      tpu.vector_store %arg7[%c0_26, %c0_27, %c0_28], %43 {strides = array<i32>} : memref<1x1x512xf32, #tpu.memory_space<vmem>>, vector<1x1x512xf32>,
    } else {
    }
    %true = arith.constant true
    %21 = arith.xori %18, %true : i1
    %22 = arith.extui %21 : i1 to i32
    %c0_i32_11 = arith.constant 0 : i32
    %23 = arith.cmpi ne, %22, %c0_i32_11 : i32
    scf.if %23 {
      %c0_12 = arith.constant 0 : index
      %c0_13 = arith.constant 0 : index
      %c0_14 = arith.constant 0 : index
      %24 = vector.load %arg6[%c0_12, %c0_13, %c0_14] : memref<1x1x512xf32, #tpu.memory_space<vmem>>, vector<1x1x512xf32>
      %cst_15 = arith.constant dense<0.000000e+00> : vector<512xf32>
      %25 = vector.multi_reduction <add>, %11, %cst_15 [0] : vector<16x512xf32> to vector<512xf32>
      %26 = vector.shape_cast %25 : vector<512xf32> to vector<1x512xf32>
      %27 = vector.shape_cast %26 : vector<1x512xf32> to vector<1x1x512xf32>
      %28 = arith.addf %24, %27 : vector<1x1x512xf32>
      %c0_16 = arith.constant 0 : index
      %c0_17 = arith.constant 0 : index
      %c0_18 = arith.constant 0 : index
      %29 = vector.load %arg6[%c0_16, %c0_17, %c0_18] : memref<1x1x512xf32, #tpu.memory_space<vmem>>, vector<1x1x512xf32>
      tpu.vector_store %arg6[%c0_16, %c0_17, %c0_18], %28 {strides = array<i32>} : memref<1x1x512xf32, #tpu.memory_space<vmem>>, vector<1x1x512xf32>,
      %c0_19 = arith.constant 0 : index
      %c0_20 = arith.constant 0 : index
      %c0_21 = arith.constant 0 : index
      %30 = vector.load %arg7[%c0_19, %c0_20, %c0_21] : memref<1x1x512xf32, #tpu.memory_space<vmem>>, vector<1x1x512xf32>
      %31 = arith.mulf %11, %11 : vector<16x512xf32>
      %cst_22 = arith.constant dense<0.000000e+00> : vector<512xf32>
      %32 = vector.multi_reduction <add>, %31, %cst_22 [0] : vector<16x512xf32> to vector<512xf32>
      %33 = vector.shape_cast %32 : vector<512xf32> to vector<1x512xf32>
      %34 = vector.shape_cast %33 : vector<1x512xf32> to vector<1x1x512xf32>
      %35 = arith.addf %30, %34 : vector<1x1x512xf32>
      %c0_23 = arith.constant 0 : index
      %c0_24 = arith.constant 0 : index
      %c0_25 = arith.constant 0 : index
      %36 = vector.load %arg7[%c0_23, %c0_24, %c0_25] : memref<1x1x512xf32, #tpu.memory_space<vmem>>, vector<1x1x512xf32>
      tpu.vector_store %arg7[%c0_23, %c0_24, %c0_25], %35 {strides = array<i32>} : memref<1x1x512xf32, #tpu.memory_space<vmem>>, vector<1x1x512xf32>,
    } else {
    }
    return
  }
  func.func @transform_0(%arg0: i32, %arg1: i32) -> (i32, i32) {
    %c1_i32 = arith.constant 1 : i32
    %0 = arith.muli %arg0, %c1_i32 : i32
    %1 = arith.addi %0, %arg1 : i32
    %c0_i32 = arith.constant 0 : i32
    %c0_i32_0 = arith.constant 0 : i32
    return %1, %c0_i32 : i32, i32
  }
  func.func @transform_1(%arg0: i32, %arg1: i32) -> (i32, i32) {
    %c0_i32 = arith.constant 0 : i32
    %c0_i32_0 = arith.constant 0 : i32
    %c0_i32_1 = arith.constant 0 : i32
    return %c0_i32, %c0_i32_0 : i32, i32
  }
  func.func @transform_2(%arg0: i32, %arg1: i32) -> (i32, i32) {
    %c0_i32 = arith.constant 0 : i32
    %c0_i32_0 = arith.constant 0 : i32
    %c0_i32_1 = arith.constant 0 : i32
    return %c0_i32, %c0_i32_0 : i32, i32
  }
  func.func @transform_3(%arg0: i32, %arg1: i32) -> (i32, i32) {
    %c1_i32 = arith.constant 1 : i32
    %0 = arith.muli %arg0, %c1_i32 : i32
    %1 = arith.addi %0, %arg1 : i32
    %c0_i32 = arith.constant 0 : i32
    %c0_i32_0 = arith.constant 0 : i32
    return %1, %c0_i32 : i32, i32
  }
  func.func @transform_4(%arg0: i32, %arg1: i32) -> (i32, i32, i32) {
    %c0_i32 = arith.constant 0 : i32
    %c0_i32_0 = arith.constant 0 : i32
    %c0_i32_1 = arith.constant 0 : i32
    return %arg0, %c0_i32, %c0_i32_0 : i32, i32, i32
  }
  func.func @transform_5(%arg0: i32, %arg1: i32) -> (i32, i32, i32) {
    %c0_i32 = arith.constant 0 : i32
    %c0_i32_0 = arith.constant 0 : i32
    %c0_i32_1 = arith.constant 0 : i32
    return %arg0, %c0_i32, %c0_i32_0 : i32, i32, i32
  }
}

module attributes {stable_mosaic.version = 11 : i64} {
  func.func @kernel(%arg0: i32, %arg1: i32, %arg2: memref<16x512xbf16, #tpu.memory_space<vmem>>, %arg3: memref<512x128xbf16, #tpu.memory_space<vmem>>, %arg4: memref<1x128xf32, #tpu.memory_space<vmem>>, %arg5: memref<16x128xbf16, #tpu.memory_space<vmem>>, %arg6: memref<1x1x128xf32, #tpu.memory_space<vmem>>, %arg7: memref<1x1x128xf32, #tpu.memory_space<vmem>>) attributes {dimension_semantics = [#tpu.dimension_semantics<parallel>, #tpu.dimension_semantics<arbitrary>], iteration_bounds = array<i64: 1, 1>, scalar_prefetch = 0 : i64, scratch_operands = 0 : i64, tpu.core_type = #tpu.core_type<tc>, window_params = [{transform_indices = @transform_0, window_bounds = array<i64: 16, 512>}, {pipeline_mode = #tpu.pipeline_mode<synchronous>, transform_indices = @transform_1, window_bounds = array<i64: 512, 128>}, {pipeline_mode = #tpu.pipeline_mode<synchronous>, transform_indices = @transform_2, window_bounds = array<i64: 1, 128>}, {transform_indices = @transform_3, window_bounds = array<i64: 16, 128>}, {transform_indices = @transform_4, window_bounds = array<i64: 1, 1, 128>}, {transform_indices = @transform_5, window_bounds = array<i64: 1, 1, 128>}]} {
    %c0_i32 = arith.constant 0 : i32
    %0 = arith.cmpi eq, %arg1, %c0_i32 : i32
    %1 = arith.extui %0 : i1 to i32
    %c0_i32_0 = arith.constant 0 : i32
    %2 = arith.cmpi ne, %1, %c0_i32_0 : i32
    scf.if %2 {
      %cst_12 = arith.constant 0.000000e+00 : f32
      %23 = vector.broadcast %cst_12 : f32 to vector<1x1x128xf32>
      %c0_13 = arith.constant 0 : index
      %c0_14 = arith.constant 0 : index
      %c0_15 = arith.constant 0 : index
      %24 = vector.load %arg6[%c0_13, %c0_14, %c0_15] : memref<1x1x128xf32, #tpu.memory_space<vmem>>, vector<1x1x128xf32>
      tpu.vector_store %arg6[%c0_13, %c0_14, %c0_15], %23 {strides = array<i32>} : memref<1x1x128xf32, #tpu.memory_space<vmem>>, vector<1x1x128xf32>,
      %cst_16 = arith.constant 0.000000e+00 : f32
      %25 = vector.broadcast %cst_16 : f32 to vector<1x1x128xf32>
      %c0_17 = arith.constant 0 : index
      %c0_18 = arith.constant 0 : index
      %c0_19 = arith.constant 0 : index
      %26 = vector.load %arg7[%c0_17, %c0_18, %c0_19] : memref<1x1x128xf32, #tpu.memory_space<vmem>>, vector<1x1x128xf32>
      tpu.vector_store %arg7[%c0_17, %c0_18, %c0_19], %25 {strides = array<i32>} : memref<1x1x128xf32, #tpu.memory_space<vmem>>, vector<1x1x128xf32>,
    } else {
    }
    %c0 = arith.constant 0 : index
    %c0_1 = arith.constant 0 : index
    %3 = vector.load %arg2[%c0, %c0_1] : memref<16x512xbf16, #tpu.memory_space<vmem>>, vector<16x512xbf16>
    %c0_2 = arith.constant 0 : index
    %c0_3 = arith.constant 0 : index
    %4 = vector.load %arg3[%c0_2, %c0_3] : memref<512x128xbf16, #tpu.memory_space<vmem>>, vector<512x128xbf16>
    %cst = arith.constant dense<0.000000e+00> : vector<16x128xf32>
    %5 = tpu.matmul %3, %4, %cst {dimension_numbers = #tpu.dot_dimension_numbers<[1], [0], [0], [1], [0, 0, 1, 1], [], []>} : vector<16x512xbf16>, vector<512x128xbf16>, vector<16x128xf32> -> vector<16x128xf32>
    %c0_4 = arith.constant 0 : index
    %c0_5 = arith.constant 0 : index
    %6 = vector.load %arg4[%c0_4, %c0_5] : memref<1x128xf32, #tpu.memory_space<vmem>>, vector<1x128xf32>
    %7 = vector.broadcast %6 : vector<1x128xf32> to vector<16x128xf32>
    %8 = arith.addf %5, %7 : vector<16x128xf32>
    %cst_6 = arith.constant 0.000000e+00 : f32
    %9 = vector.broadcast %cst_6 : f32 to vector<16x128xf32>
    %10 = arith.maximumf %8, %9 : vector<16x128xf32>
    %11 = arith.truncf %10 : vector<16x128xf32> to vector<16x128xbf16>
    %c0_7 = arith.constant 0 : index
    %c0_8 = arith.constant 0 : index
    %12 = vector.load %arg5[%c0_7, %c0_8] : memref<16x128xbf16, #tpu.memory_space<vmem>>, vector<16x128xbf16>
    tpu.vector_store %arg5[%c0_7, %c0_8], %11 {strides = array<i32>} : memref<16x128xbf16, #tpu.memory_space<vmem>>, vector<16x128xbf16>,
    %c1_i32 = arith.constant 1 : i32
    %13 = arith.muli %arg0, %c1_i32 : i32
    %14 = arith.addi %13, %arg1 : i32
    %c1_i32_9 = arith.constant 1 : i32
    %15 = arith.addi %14, %c1_i32_9 : i32
    %c16_i32 = arith.constant 16 : i32
    %16 = arith.muli %15, %c16_i32 : i32
    %c8_i32 = arith.constant 8 : i32
    %17 = arith.cmpi sgt, %16, %c8_i32 : i32
    %18 = arith.extui %17 : i1 to i32
    %c0_i32_10 = arith.constant 0 : i32
    %19 = arith.cmpi ne, %18, %c0_i32_10 : i32
    scf.if %19 {
      %c16_i32_12 = arith.constant 16 : i32
      %23 = arith.muli %14, %c16_i32_12 : i32
      %24 = tpu.iota {dimensions = array<i32: 0>} : vector<16x128xi32>
      %25 = vector.broadcast %23 : i32 to vector<16x128xi32>
      %26 = arith.addi %25, %24 : vector<16x128xi32>
      %c8_i32_13 = arith.constant 8 : i32
      %27 = vector.broadcast %c8_i32_13 : i32 to vector<16x128xi32>
      %28 = arith.cmpi slt, %26, %27 : vector<16x128xi32>
      %cst_14 = arith.constant 0.000000e+00 : f32
      %29 = vector.broadcast %cst_14 : f32 to vector<16x128xf32>
      %30 = arith.select %28, %10, %29 : vector<16x128xi1>, vector<16x128xf32>
      %c0_15 = arith.constant 0 : index
      %c0_16 = arith.constant 0 : index
      %c0_17 = arith.constant 0 : index
      %31 = vector.load %arg6[%c0_15, %c0_16, %c0_17] : memref<1x1x128xf32, #tpu.memory_space<vmem>>, vector<1x1x128xf32>
      %cst_18 = arith.constant dense<0.000000e+00> : vector<128xf32>
      %32 = vector.multi_reduction <add>, %30, %cst_18 [0] : vector<16x128xf32> to vector<128xf32>
      %33 = vector.shape_cast %32 : vector<128xf32> to vector<1x128xf32>
      %34 = vector.shape_cast %33 : vector<1x128xf32> to vector<1x1x128xf32>
      %35 = arith.addf %31, %34 : vector<1x1x128xf32>
      %c0_19 = arith.constant 0 : index
      %c0_20 = arith.constant 0 : index
      %c0_21 = arith.constant 0 : index
      %36 = vector.load %arg6[%c0_19, %c0_20, %c0_21] : memref<1x1x128xf32, #tpu.memory_space<vmem>>, vector<1x1x128xf32>
      tpu.vector_store %arg6[%c0_19, %c0_20, %c0_21], %35 {strides = array<i32>} : memref<1x1x128xf32, #tpu.memory_space<vmem>>, vector<1x1x128xf32>,
      %c0_22 = arith.constant 0 : index
      %c0_23 = arith.constant 0 : index
      %c0_24 = arith.constant 0 : index
      %37 = vector.load %arg7[%c0_22, %c0_23, %c0_24] : memref<1x1x128xf32, #tpu.memory_space<vmem>>, vector<1x1x128xf32>
      %38 = arith.mulf %30, %30 : vector<16x128xf32>
      %cst_25 = arith.constant dense<0.000000e+00> : vector<128xf32>
      %39 = vector.multi_reduction <add>, %38, %cst_25 [0] : vector<16x128xf32> to vector<128xf32>
      %40 = vector.shape_cast %39 : vector<128xf32> to vector<1x128xf32>
      %41 = vector.shape_cast %40 : vector<1x128xf32> to vector<1x1x128xf32>
      %42 = arith.addf %37, %41 : vector<1x1x128xf32>
      %c0_26 = arith.constant 0 : index
      %c0_27 = arith.constant 0 : index
      %c0_28 = arith.constant 0 : index
      %43 = vector.load %arg7[%c0_26, %c0_27, %c0_28] : memref<1x1x128xf32, #tpu.memory_space<vmem>>, vector<1x1x128xf32>
      tpu.vector_store %arg7[%c0_26, %c0_27, %c0_28], %42 {strides = array<i32>} : memref<1x1x128xf32, #tpu.memory_space<vmem>>, vector<1x1x128xf32>,
    } else {
    }
    %true = arith.constant true
    %20 = arith.xori %17, %true : i1
    %21 = arith.extui %20 : i1 to i32
    %c0_i32_11 = arith.constant 0 : i32
    %22 = arith.cmpi ne, %21, %c0_i32_11 : i32
    scf.if %22 {
      %c0_12 = arith.constant 0 : index
      %c0_13 = arith.constant 0 : index
      %c0_14 = arith.constant 0 : index
      %23 = vector.load %arg6[%c0_12, %c0_13, %c0_14] : memref<1x1x128xf32, #tpu.memory_space<vmem>>, vector<1x1x128xf32>
      %cst_15 = arith.constant dense<0.000000e+00> : vector<128xf32>
      %24 = vector.multi_reduction <add>, %10, %cst_15 [0] : vector<16x128xf32> to vector<128xf32>
      %25 = vector.shape_cast %24 : vector<128xf32> to vector<1x128xf32>
      %26 = vector.shape_cast %25 : vector<1x128xf32> to vector<1x1x128xf32>
      %27 = arith.addf %23, %26 : vector<1x1x128xf32>
      %c0_16 = arith.constant 0 : index
      %c0_17 = arith.constant 0 : index
      %c0_18 = arith.constant 0 : index
      %28 = vector.load %arg6[%c0_16, %c0_17, %c0_18] : memref<1x1x128xf32, #tpu.memory_space<vmem>>, vector<1x1x128xf32>
      tpu.vector_store %arg6[%c0_16, %c0_17, %c0_18], %27 {strides = array<i32>} : memref<1x1x128xf32, #tpu.memory_space<vmem>>, vector<1x1x128xf32>,
      %c0_19 = arith.constant 0 : index
      %c0_20 = arith.constant 0 : index
      %c0_21 = arith.constant 0 : index
      %29 = vector.load %arg7[%c0_19, %c0_20, %c0_21] : memref<1x1x128xf32, #tpu.memory_space<vmem>>, vector<1x1x128xf32>
      %30 = arith.mulf %10, %10 : vector<16x128xf32>
      %cst_22 = arith.constant dense<0.000000e+00> : vector<128xf32>
      %31 = vector.multi_reduction <add>, %30, %cst_22 [0] : vector<16x128xf32> to vector<128xf32>
      %32 = vector.shape_cast %31 : vector<128xf32> to vector<1x128xf32>
      %33 = vector.shape_cast %32 : vector<1x128xf32> to vector<1x1x128xf32>
      %34 = arith.addf %29, %33 : vector<1x1x128xf32>
      %c0_23 = arith.constant 0 : index
      %c0_24 = arith.constant 0 : index
      %c0_25 = arith.constant 0 : index
      %35 = vector.load %arg7[%c0_23, %c0_24, %c0_25] : memref<1x1x128xf32, #tpu.memory_space<vmem>>, vector<1x1x128xf32>
      tpu.vector_store %arg7[%c0_23, %c0_24, %c0_25], %34 {strides = array<i32>} : memref<1x1x128xf32, #tpu.memory_space<vmem>>, vector<1x1x128xf32>,
    } else {
    }
    return
  }
  func.func @transform_0(%arg0: i32, %arg1: i32) -> (i32, i32) {
    %c1_i32 = arith.constant 1 : i32
    %0 = arith.muli %arg0, %c1_i32 : i32
    %1 = arith.addi %0, %arg1 : i32
    %c0_i32 = arith.constant 0 : i32
    %c0_i32_0 = arith.constant 0 : i32
    return %1, %c0_i32 : i32, i32
  }
  func.func @transform_1(%arg0: i32, %arg1: i32) -> (i32, i32) {
    %c0_i32 = arith.constant 0 : i32
    %c0_i32_0 = arith.constant 0 : i32
    %c0_i32_1 = arith.constant 0 : i32
    return %c0_i32, %c0_i32_0 : i32, i32
  }
  func.func @transform_2(%arg0: i32, %arg1: i32) -> (i32, i32) {
    %c0_i32 = arith.constant 0 : i32
    %c0_i32_0 = arith.constant 0 : i32
    %c0_i32_1 = arith.constant 0 : i32
    return %c0_i32, %c0_i32_0 : i32, i32
  }
  func.func @transform_3(%arg0: i32, %arg1: i32) -> (i32, i32) {
    %c1_i32 = arith.constant 1 : i32
    %0 = arith.muli %arg0, %c1_i32 : i32
    %1 = arith.addi %0, %arg1 : i32
    %c0_i32 = arith.constant 0 : i32
    %c0_i32_0 = arith.constant 0 : i32
    return %1, %c0_i32 : i32, i32
  }
  func.func @transform_4(%arg0: i32, %arg1: i32) -> (i32, i32, i32) {
    %c0_i32 = arith.constant 0 : i32
    %c0_i32_0 = arith.constant 0 : i32
    %c0_i32_1 = arith.constant 0 : i32
    return %arg0, %c0_i32, %c0_i32_0 : i32, i32, i32
  }
  func.func @transform_5(%arg0: i32, %arg1: i32) -> (i32, i32, i32) {
    %c0_i32 = arith.constant 0 : i32
    %c0_i32_0 = arith.constant 0 : i32
    %c0_i32_1 = arith.constant 0 : i32
    return %arg0, %c0_i32, %c0_i32_0 : i32, i32, i32
  }
}

module attributes {stable_mosaic.version = 11 : i64} {
  func.func @kernel(%arg0: i32, %arg1: memref<16x128xbf16, #tpu.memory_space<vmem>>, %arg2: memref<128x128xbf16, #tpu.memory_space<vmem>>, %arg3: memref<1x128xf32, #tpu.memory_space<vmem>>, %arg4: memref<16x128xf32, #tpu.memory_space<vmem>>) attributes {dimension_semantics = [#tpu.dimension_semantics<parallel>], iteration_bounds = array<i64: 1>, scalar_prefetch = 0 : i64, scratch_operands = 0 : i64, tpu.core_type = #tpu.core_type<tc>, window_params = [{transform_indices = @transform_0, window_bounds = array<i64: 16, 128>}, {pipeline_mode = #tpu.pipeline_mode<synchronous>, transform_indices = @transform_1, window_bounds = array<i64: 128, 128>}, {pipeline_mode = #tpu.pipeline_mode<synchronous>, transform_indices = @transform_2, window_bounds = array<i64: 1, 128>}, {transform_indices = @transform_3, window_bounds = array<i64: 16, 128>}]} {
    %c0 = arith.constant 0 : index
    %c0_0 = arith.constant 0 : index
    %0 = vector.load %arg1[%c0, %c0_0] : memref<16x128xbf16, #tpu.memory_space<vmem>>, vector<16x128xbf16>
    %c0_1 = arith.constant 0 : index
    %c0_2 = arith.constant 0 : index
    %1 = vector.load %arg2[%c0_1, %c0_2] : memref<128x128xbf16, #tpu.memory_space<vmem>>, vector<128x128xbf16>
    %cst = arith.constant dense<0.000000e+00> : vector<16x128xf32>
    %2 = tpu.matmul %0, %1, %cst {dimension_numbers = #tpu.dot_dimension_numbers<[1], [0], [0], [1], [0, 0, 1, 1], [], []>} : vector<16x128xbf16>, vector<128x128xbf16>, vector<16x128xf32> -> vector<16x128xf32>
    %c0_3 = arith.constant 0 : index
    %c0_4 = arith.constant 0 : index
    %3 = vector.load %arg3[%c0_3, %c0_4] : memref<1x128xf32, #tpu.memory_space<vmem>>, vector<1x128xf32>
    %4 = vector.broadcast %3 : vector<1x128xf32> to vector<16x128xf32>
    %5 = arith.addf %2, %4 : vector<16x128xf32>
    %c0_5 = arith.constant 0 : index
    %c0_6 = arith.constant 0 : index
    %6 = vector.load %arg4[%c0_5, %c0_6] : memref<16x128xf32, #tpu.memory_space<vmem>>, vector<16x128xf32>
    tpu.vector_store %arg4[%c0_5, %c0_6], %5 {strides = array<i32>} : memref<16x128xf32, #tpu.memory_space<vmem>>, vector<16x128xf32>,
    return
  }
  func.func @transform_0(%arg0: i32) -> (i32, i32) {
    %c0_i32 = arith.constant 0 : i32
    %c0_i32_0 = arith.constant 0 : i32
    return %arg0, %c0_i32 : i32, i32
  }
  func.func @transform_1(%arg0: i32) -> (i32, i32) {
    %c0_i32 = arith.constant 0 : i32
    %c0_i32_0 = arith.constant 0 : i32
    %c0_i32_1 = arith.constant 0 : i32
    return %c0_i32, %c0_i32_0 : i32, i32
  }
  func.func @transform_2(%arg0: i32) -> (i32, i32) {
    %c0_i32 = arith.constant 0 : i32
    %c0_i32_0 = arith.constant 0 : i32
    %c0_i32_1 = arith.constant 0 : i32
    return %c0_i32, %c0_i32_0 : i32, i32
  }
  func.func @transform_3(%arg0: i32) -> (i32, i32) {
    %c0_i32 = arith.constant 0 : i32
    %c0_i32_0 = arith.constant 0 : i32
    return %arg0, %c0_i32 : i32, i32
  }
}

</mosaic_0001>

<llo_original>
// kernel: tabular_model_forward.4
$region0: #{tabular_model_forward.4}
  #allocation0 [shape = 'u32[]', space=smem, size = 0x4, offset = 0x4, fixed_abs, tag = 'smem constant byte address 0x4 - core index']
  #allocation1 [shape = 'u32[144,128]{1,0:T(1,128)}', space=vmem, size = 0x12000, scoped, tag = 'internal scratch']
  %s0 = inlined_call_operand.vmem [shape: f32[16,128], index: 0, kind: input, shape index: {}]
  %s1 = inlined_call_operand.vmem [shape: f32[1,1,128], index: 1, kind: output, shape index: {0}]
  %s2 = inlined_call_operand.vmem [shape: f32[1,1,128], index: 2, kind: output, shape index: {1}]
  %3 = xla_tuple %s1, %s2
  %s4 = sld [smem:[#allocation0]]
  $region26: #{tabular_model_forward.4} parent=0
    _
  %s6 = ssub.s32 1, %s4
  %s7 = scalar_select 0, %s6, %s4
  // Predicated region
  $region2: #{tabular_model_forward.4} parent=0 // pred_check
    _
  $region3: #{tabular_model_forward.4} parent=0 // pred_check_branch
    %9 = sbr.rel (0) target = $region5
  $region4: #{tabular_model_forward.4} parent=0 // pred_region
    %s10 = sadd.s32 0, 0
    %s11 = smul.u32 2, %s10
    %p12 = scmp.lt.s32.totalorder %s11, 1
    %s13 = scalar_select %p12, %s11, 1
    %s14 = smul.addr %s13, 8
    %s15 = scalar_lea.vmem %s0, %s14
    %s16 = sadd.s32 0, 0
    %s17 = smul.u32 2, %s16
  $region5: #{tabular_model_forward.4} parent=0 // pred_fallthru
    _
  %s18 = sadd.s32 0, 0
  %s19 = smul.u32 2, %s18
  %p20 = scmp.lt.s32.totalorder %s19, 1
  %s21 = scalar_select %p20, %s19, 1
  %s22 = smul.addr %s21, 8
  %s23 = scalar_lea.vmem %s0, %s22
  %s24 = sadd.s32 0, 0
  %s25 = smul.u32 2, %s24
  %p26 = scmp.lt.s32.totalorder %s25, 1
  %s27 = scalar_select %p26, %s25, 1
  %s28 = smul.addr %s27, 8
  %s29 = scalar_lea.vmem %s0, %s28
  %s30 = sadd.s32 0, 0
  %s31 = smul.u32 2, %s30
  %p32 = scmp.eq.s32.totalorder 0, 0
  // Predicated region
  $region6: #{tabular_model_forward.4} parent=0 // pred_check
    %p33 = pneg %p32
  $region7: #{tabular_model_forward.4} parent=0 // pred_check_branch
    %35 = sbr.rel (%p33) target = $region9
  $region8: #{tabular_model_forward.4} parent=0 // pred_region
    %36 = vst [vmem:[%s1] sm:$0x1] 0.0
    %37 = vst [vmem:[%s2] sm:$0x1] 0.0
  $region9: #{tabular_model_forward.4} parent=0 // pred_fallthru
    _
  %v38 = vld [vmem:[%s29] sm:$0xff]
  %v39 = vld [vmem:[%s29 + $0x8] sm:$0xff]
  %v40 = vld [vmem:[%s1] sm:$0x1]
  %v41 = vadd.f32 %v38, %v39
  %v42 = vrot.slane %v41, 4
  %v43 = vadd.f32 %v41, %v42
  %v44 = vrot.slane %v43, 2
  %v45 = vadd.f32 %v43, %v44
  %v46 = vrot.slane %v45, 1
  %v47 = vadd.f32 %v45, %v46
  %v48 = vadd.f32 %v40, %v47
  %49 = vst [vmem:[%s1] sm:$0x1] %v48
  %v50 = vld [vmem:[%s2] sm:$0x1]
  %v51 = vmul.f32 %v38, %v38
  %v52 = vmul.f32 %v39, %v39
  %v53 = vadd.f32 %v51, %v52
  %v54 = vrot.slane %v53, 4
  %v55 = vadd.f32 %v53, %v54
  %v56 = vrot.slane %v55, 2
  %v57 = vadd.f32 %v55, %v56
  %v58 = vrot.slane %v57, 1
  %v59 = vadd.f32 %v57, %v58
  %v60 = vadd.f32 %v50, %v59
  %61 = vst [vmem:[%s2] sm:$0x1] %v60
  // Predicated region
  $region10: #{tabular_model_forward.4} parent=0 // pred_check
    _
  $region11: #{tabular_model_forward.4} parent=0 // pred_check_branch
    %63 = sbr.rel (0) target = $region13
  $region12: #{tabular_model_forward.4} parent=0 // pred_region
    _
  $region13: #{tabular_model_forward.4} parent=0 // pred_fallthru
    _
  // Predicated region
  $region14: #{tabular_model_forward.4} parent=0 // pred_check
    _
  $region15: #{tabular_model_forward.4} parent=0 // pred_check_branch
    %65 = sbr.rel (0) target = $region17
  $region16: #{tabular_model_forward.4} parent=0 // pred_region
    _
  $region17: #{tabular_model_forward.4} parent=0 // pred_fallthru
    _
  // Predicated region
  $region18: #{tabular_model_forward.4} parent=0 // pred_check
    _
  $region19: #{tabular_model_forward.4} parent=0 // pred_check_branch
    %67 = sbr.rel (0) target = $region21
  $region20: #{tabular_model_forward.4} parent=0 // pred_region
    _
  $region21: #{tabular_model_forward.4} parent=0 // pred_fallthru
    _
  // Predicated region
  $region22: #{tabular_model_forward.4} parent=0 // pred_check
    _
  $region23: #{tabular_model_forward.4} parent=0 // pred_check_branch
    %69 = sbr.rel (0) target = $region25
  $region24: #{tabular_model_forward.4} parent=0 // pred_region
    _
  $region25: #{tabular_model_forward.4} parent=0 // pred_fallthru
    _

// kernel: tabular_model_forward.5
$region0: #{tabular_model_forward.5}
  #allocation0 [shape = 'u32[]', space=smem, size = 0x4, offset = 0x4, fixed_abs, tag = 'smem constant byte address 0x4 - core index']
  #allocation1 [shape = 'u32[144,128]{1,0:T(1,128)}', space=vmem, size = 0x12000, scoped, tag = 'internal scratch']
  %s0 = inlined_call_operand.vmem [shape: f32[16,128], index: 0, kind: input, shape index: {}]
  %s1 = inlined_call_operand.vmem [shape: bf16[128,512], index: 1, kind: input, shape index: {}]
  %s2 = inlined_call_operand.vmem [shape: f32[1,512], index: 2, kind: input, shape index: {}]
  %s3 = inlined_call_operand.vmem [shape: bf16[16,512], index: 3, kind: output, shape index: {0}]
  %s4 = inlined_call_operand.vmem [shape: f32[1,1,512], index: 4, kind: output, shape index: {1}]
  %s5 = inlined_call_operand.vmem [shape: f32[1,1,512], index: 5, kind: output, shape index: {2}]
  %6 = xla_tuple %s3, %s4, %s5
  %s7 = sld [smem:[#allocation0]]
  $region50: #{tabular_model_forward.5} parent=0
    _
  %s9 = ssub.s32 1, %s7
  %s10 = scalar_select 0, %s9, %s7
  // Predicated region
  $region2: #{tabular_model_forward.5} parent=0 // pred_check
    _
  $region3: #{tabular_model_forward.5} parent=0 // pred_check_branch
    %12 = sbr.rel (0) target = $region5
  $region4: #{tabular_model_forward.5} parent=0 // pred_region
    %s13 = sadd.s32 0, 0
    %s14 = smul.u32 2, %s13
    %p15 = scmp.lt.s32.totalorder %s14, 1
    %s16 = scalar_select %p15, %s14, 1
    %s17 = smul.addr %s16, 8
    %s18 = scalar_lea.vmem %s0, %s17
    %s19 = sadd.s32 0, 0
    %s20 = smul.u32 2, %s19
  $region5: #{tabular_model_forward.5} parent=0 // pred_fallthru
    _
  // Predicated region
  $region6: #{tabular_model_forward.5} parent=0 // pred_check
    _
  $region7: #{tabular_model_forward.5} parent=0 // pred_check_branch
    %22 = sbr.rel (0) target = $region9
  $region8: #{tabular_model_forward.5} parent=0 // pred_region
    _
  $region9: #{tabular_model_forward.5} parent=0 // pred_fallthru
    _
  // Predicated region
  $region10: #{tabular_model_forward.5} parent=0 // pred_check
    _
  $region11: #{tabular_model_forward.5} parent=0 // pred_check_branch
    %24 = sbr.rel (0) target = $region13
  $region12: #{tabular_model_forward.5} parent=0 // pred_region
    _
  $region13: #{tabular_model_forward.5} parent=0 // pred_fallthru
    _
  %s25 = sadd.s32 0, 0
  %s26 = smul.u32 2, %s25
  %p27 = scmp.lt.s32.totalorder %s26, 1
  %s28 = scalar_select %p27, %s26, 1
  %s29 = smul.addr %s28, 8
  %s30 = scalar_lea.vmem %s0, %s29
  %s31 = sadd.s32 0, 0
  %s32 = smul.u32 2, %s31
  %p33 = scmp.lt.s32.totalorder %s32, 1
  %s34 = scalar_select %p33, %s32, 1
  %s35 = smul.addr %s34, 4
  %s36 = smul.addr %s35, 4
  %s37 = scalar_lea.vmem %s3, %s36
  %s38 = sadd.s32 0, 0
  %s39 = smul.u32 2, %s38
  %p40 = scmp.lt.s32.totalorder %s39, 1
  %s41 = scalar_select %p40, %s39, 1
  %s42 = smul.addr %s41, 8
  %s43 = scalar_lea.vmem %s0, %s42
  %s44 = sadd.s32 0, 0
  %s45 = smul.u32 2, %s44
  %s46 = sadd.s32 0, 0
  %s47 = smul.u32 2, %s46
  %p48 = scmp.lt.s32.totalorder %s47, 1
  %s49 = scalar_select %p48, %s47, 1
  %s50 = smul.addr %s49, 4
  %s51 = smul.addr %s50, 4
  %s52 = scalar_lea.vmem %s3, %s51
  %s53 = sadd.s32 0, 0
  %s54 = smul.u32 2, %s53
  %p56 = scmp.eq.s32.totalorder 0, 0
  // Predicated region
  $region14: #{tabular_model_forward.5} parent=0 // pred_check
    %p57 = pneg %p56
  $region15: #{tabular_model_forward.5} parent=0 // pred_check_branch
    %59 = sbr.rel (%p57) target = $region17
  $region16: #{tabular_model_forward.5} parent=0 // pred_region
    %v60 = vlaneseq
    %vm61 = vcmp.ge.s32.totalorder %v60, 0
    %vm62 = vcmp.lt.s32.totalorder %v60, 512
    %vm63 = vmand %vm61, %vm62
    %64 = vst.msk [vmem:[%s4] sm:$0xf] %vm63, 0.0
    %65 = vst.msk [vmem:[%s5] sm:$0xf] %vm63, 0.0
  $region17: #{tabular_model_forward.5} parent=0 // pred_fallthru
    _
  %v66 = vld [vmem:[%s43] sm:$0xff]
  %v67 = vld [vmem:[%s43 + $0x8] sm:$0xff]
  %v68 = vpack.c.bf16 %v67, %v66
  %v69 = vld [vmem:[%s1] sm:$0xff]
  %v70 = vld [vmem:[%s1 + $0x8] sm:$0xff]
  %v71 = vld [vmem:[%s1 + $0x10] sm:$0xff]
  %v72 = vld [vmem:[%s1 + $0x18] sm:$0xff]
  %v73 = vld [vmem:[%s1 + $0x20] sm:$0xff]
  %v74 = vld [vmem:[%s1 + $0x28] sm:$0xff]
  %v75 = vld [vmem:[%s1 + $0x30] sm:$0xff]
  %v76 = vld [vmem:[%s1 + $0x38] sm:$0xff]
  %v77 = vld [vmem:[%s1 + $0x40] sm:$0xff]
  %v78 = vld [vmem:[%s1 + $0x48] sm:$0xff]
  %v79 = vld [vmem:[%s1 + $0x50] sm:$0xff]
  %v80 = vld [vmem:[%s1 + $0x58] sm:$0xff]
  %v81 = vld [vmem:[%s1 + $0x60] sm:$0xff]
  %v82 = vld [vmem:[%s1 + $0x68] sm:$0xff]
  %v83 = vld [vmem:[%s1 + $0x70] sm:$0xff]
  %v84 = vld [vmem:[%s1 + $0x78] sm:$0xff]
  %v85 = vld [vmem:[%s1 + $0x80] sm:$0xff]
  %v86 = vld [vmem:[%s1 + $0x88] sm:$0xff]
  %v87 = vld [vmem:[%s1 + $0x90] sm:$0xff]
  %v88 = vld [vmem:[%s1 + $0x98] sm:$0xff]
  %v89 = vld [vmem:[%s1 + $0xa0] sm:$0xff]
  %v90 = vld [vmem:[%s1 + $0xa8] sm:$0xff]
  %v91 = vld [vmem:[%s1 + $0xb0] sm:$0xff]
  %v92 = vld [vmem:[%s1 + $0xb8] sm:$0xff]
  %v93 = vld [vmem:[%s1 + $0xc0] sm:$0xff]
  %v94 = vld [vmem:[%s1 + $0xc8] sm:$0xff]
  %v95 = vld [vmem:[%s1 + $0xd0] sm:$0xff]
  %v96 = vld [vmem:[%s1 + $0xd8] sm:$0xff]
  %v97 = vld [vmem:[%s1 + $0xe0] sm:$0xff]
  %v98 = vld [vmem:[%s1 + $0xe8] sm:$0xff]
  %v99 = vld [vmem:[%s1 + $0xf0] sm:$0xff]
  %v100 = vld [vmem:[%s1 + $0xf8] sm:$0xff]
  %v101 = vld [vmem:[%s2] sm:$0xf]
  %v103 = vlaneseq
  %v104 = vshrl.u32 %v103, 7
  %v105 = vsub.s32 0, %v104
  %v106 = vrot.slane %v101, %v105
  %v107 = vlaneseq
  %v108 = vshrl.u32 %v107, 7
  %v109 = vsub.s32 1, %v108
  %v110 = vrot.slane %v101, %v109
  %v111 = vlaneseq
  %v112 = vshrl.u32 %v111, 7
  %v113 = vsub.s32 2, %v112
  %v114 = vrot.slane %v101, %v113
  %v115 = vlaneseq
  %v116 = vshrl.u32 %v115, 7
  %v117 = vsub.s32 3, %v116
  %v118 = vrot.slane %v101, %v117
  %v155 = vunpack.c.l.b16 %v69
  %v156 = vunpack.c.h.b16 %v69
  %v157 = vunpack.c.l.b16 %v70
  %v158 = vunpack.c.h.b16 %v70
  %v159 = vunpack.c.l.b16 %v71
  %v160 = vunpack.c.h.b16 %v71
  %v161 = vunpack.c.l.b16 %v72
  %v162 = vunpack.c.h.b16 %v72
  %v163 = vunpack.c.l.b16 %v73
  %v164 = vunpack.c.h.b16 %v73
  %v165 = vunpack.c.l.b16 %v74
  %v166 = vunpack.c.h.b16 %v74
  %v167 = vunpack.c.l.b16 %v75
  %v168 = vunpack.c.h.b16 %v75
  %v169 = vunpack.c.l.b16 %v76
  %v170 = vunpack.c.h.b16 %v76
  %v171 = vunpack.c.l.b16 %v77
  %v172 = vunpack.c.h.b16 %v77
  %v173 = vunpack.c.l.b16 %v78
  %v174 = vunpack.c.h.b16 %v78
  %v175 = vunpack.c.l.b16 %v79
  %v176 = vunpack.c.h.b16 %v79
  %v177 = vunpack.c.l.b16 %v80
  %v178 = vunpack.c.h.b16 %v80
  %v179 = vunpack.c.l.b16 %v81
  %v180 = vunpack.c.h.b16 %v81
  %v181 = vunpack.c.l.b16 %v82
  %v182 = vunpack.c.h.b16 %v82
  %v183 = vunpack.c.l.b16 %v83
  %v184 = vunpack.c.h.b16 %v83
  %v185 = vunpack.c.l.b16 %v84
  %v186 = vunpack.c.h.b16 %v84
  %v187 = vunpack.c.l.b16 %v85
  %v188 = vunpack.c.h.b16 %v85
  %v189 = vunpack.c.l.b16 %v86
  %v190 = vunpack.c.h.b16 %v86
  %v191 = vunpack.c.l.b16 %v87
  %v192 = vunpack.c.h.b16 %v87
  %v193 = vunpack.c.l.b16 %v88
  %v194 = vunpack.c.h.b16 %v88
  %v195 = vunpack.c.l.b16 %v89
  %v196 = vunpack.c.h.b16 %v89
  %v197 = vunpack.c.l.b16 %v90
  %v198 = vunpack.c.h.b16 %v90
  %v199 = vunpack.c.l.b16 %v91
  %v200 = vunpack.c.h.b16 %v91
  %v201 = vunpack.c.l.b16 %v92
  %v202 = vunpack.c.h.b16 %v92
  %v203 = vunpack.c.l.b16 %v93
  %v204 = vunpack.c.h.b16 %v93
  %v205 = vunpack.c.l.b16 %v94
  %v206 = vunpack.c.h.b16 %v94
  %v207 = vunpack.c.l.b16 %v95
  %v208 = vunpack.c.h.b16 %v95
  %v209 = vunpack.c.l.b16 %v96
  %v210 = vunpack.c.h.b16 %v96
  %v211 = vunpack.c.l.b16 %v97
  %v212 = vunpack.c.h.b16 %v97
  %v213 = vunpack.c.l.b16 %v98
  %v214 = vunpack.c.h.b16 %v98
  %v215 = vunpack.c.l.b16 %v99
  %v216 = vunpack.c.h.b16 %v99
  %v217 = vunpack.c.l.b16 %v100
  %v218 = vunpack.c.h.b16 %v100
  %v219 = vpack.c.b16 %v159, %v155
  %v220 = vpack.c.b16 %v160, %v156
  %v221 = vpack.c.b16 %v161, %v157
  %v222 = vpack.c.b16 %v162, %v158
  %v223 = vpack.c.b16 %v167, %v163
  %v224 = vpack.c.b16 %v168, %v164
  %v225 = vpack.c.b16 %v169, %v165
  %v226 = vpack.c.b16 %v170, %v166
  %v227 = vpack.c.b16 %v175, %v171
  %v228 = vpack.c.b16 %v176, %v172
  %v229 = vpack.c.b16 %v177, %v173
  %v230 = vpack.c.b16 %v178, %v174
  %v231 = vpack.c.b16 %v183, %v179
  %v232 = vpack.c.b16 %v184, %v180
  %v233 = vpack.c.b16 %v185, %v181
  %v234 = vpack.c.b16 %v186, %v182
  %v235 = vpack.c.b16 %v191, %v187
  %v236 = vpack.c.b16 %v192, %v188
  %v237 = vpack.c.b16 %v193, %v189
  %v238 = vpack.c.b16 %v194, %v190
  %v239 = vpack.c.b16 %v199, %v195
  %v240 = vpack.c.b16 %v200, %v196
  %v241 = vpack.c.b16 %v201, %v197
  %v242 = vpack.c.b16 %v202, %v198
  %v243 = vpack.c.b16 %v207, %v203
  %v244 = vpack.c.b16 %v208, %v204
  %v245 = vpack.c.b16 %v209, %v205
  %v246 = vpack.c.b16 %v210, %v206
  %v247 = vpack.c.b16 %v215, %v211
  %v248 = vpack.c.b16 %v216, %v212
  %v249 = vpack.c.b16 %v217, %v213
  %v250 = vpack.c.b16 %v218, %v214
  %283 = vmatprep.subr.bf16.mxu0 %v248
  %284 = vmatpush1.bf16.msra.mxu0 %v247
  %285 = vmatprep.subr.bf16.mxu0 %v244
  %286 = vmatpush1.bf16.msra.mxu0 %v243
  %287 = vmatprep.subr.bf16.mxu0 %v240
  %288 = vmatpush1.bf16.msra.mxu0 %v239
  %289 = vmatprep.subr.bf16.mxu0 %v236
  %290 = vmatpush1.bf16.msra.mxu0 %v235
  %291 = vmatprep.subr.bf16.mxu0 %v232
  %292 = vmatpush1.bf16.msra.mxu0 %v231
  %293 = vmatprep.subr.bf16.mxu0 %v228
  %294 = vmatpush1.bf16.msra.mxu0 %v227
  %295 = vmatprep.subr.bf16.mxu0 %v224
  %296 = vmatpush1.bf16.msra.mxu0 %v223
  %297 = vmatprep.subr.bf16.mxu0 %v220
  %298 = vmatpush1.bf16.msra.mxu0 %v219
  %299 = vmatprep.subr.bf16.mxu0 0
  %300 = vmatpush2.bf16.msra.mxu0 0
  %301 = vmatprep.subr.bf16.mxu0 0
  %302 = vmatpush2.bf16.msra.mxu0 0
  %303 = vmatprep.subr.bf16.mxu0 0
  %304 = vmatpush2.bf16.msra.mxu0 0
  %305 = vmatprep.subr.bf16.mxu0 0
  %306 = vmatpush2.bf16.msra.mxu0 0
  %307 = vmatprep.subr.bf16.mxu0 0
  %308 = vmatpush2.bf16.msra.mxu0 0
  %309 = vmatprep.subr.bf16.mxu0 0
  %310 = vmatpush2.bf16.msra.mxu0 0
  %311 = vmatprep.subr.bf16.mxu0 0
  %312 = vmatpush2.bf16.msra.mxu0 0
  %313 = vmatprep.subr.bf16.mxu0 0
  %314 = vmatpush2.bf16.msra.mxu0 0
  %315 = vmatprep.mubr.bf16.mxu0 0
  %316 = vmatmul.mubr.bf16.gmra.mxu0 %v68
  %v317 = vpop.f32.mrf.mxu0
  %v318 = vadd.f32 %v106, %v317
  %v319 = vpop.f32.mrf.mxu0
  %v320 = vadd.f32 %v110, %v319
  %v321 = vpop.f32.mrf.mxu0
  %v322 = vadd.f32 %v106, %v321
  %v323 = vpop.f32.mrf.mxu0
  %v324 = vadd.f32 %v110, %v323
  %325 = vdwg.mxu0
  %326 = vmatprep.subr.bf16.mxu0 %v250
  %327 = vmatpush1.bf16.msra.mxu0 %v249
  %328 = vmatprep.subr.bf16.mxu0 %v246
  %329 = vmatpush1.bf16.msra.mxu0 %v245
  %330 = vmatprep.subr.bf16.mxu0 %v242
  %331 = vmatpush1.bf16.msra.mxu0 %v241
  %332 = vmatprep.subr.bf16.mxu0 %v238
  %333 = vmatpush1.bf16.msra.mxu0 %v237
  %334 = vmatprep.subr.bf16.mxu0 %v234
  %335 = vmatpush1.bf16.msra.mxu0 %v233
  %336 = vmatprep.subr.bf16.mxu0 %v230
  %337 = vmatpush1.bf16.msra.mxu0 %v229
  %338 = vmatprep.subr.bf16.mxu0 %v226
  %339 = vmatpush1.bf16.msra.mxu0 %v225
  %340 = vmatprep.subr.bf16.mxu0 %v222
  %341 = vmatpush1.bf16.msra.mxu0 %v221
  %342 = vmatprep.subr.bf16.mxu0 0
  %343 = vmatpush2.bf16.msra.mxu0 0
  %344 = vmatprep.subr.bf16.mxu0 0
  %345 = vmatpush2.bf16.msra.mxu0 0
  %346 = vmatprep.subr.bf16.mxu0 0
  %347 = vmatpush2.bf16.msra.mxu0 0
  %348 = vmatprep.subr.bf16.mxu0 0
  %349 = vmatpush2.bf16.msra.mxu0 0
  %350 = vmatprep.subr.bf16.mxu0 0
  %351 = vmatpush2.bf16.msra.mxu0 0
  %352 = vmatprep.subr.bf16.mxu0 0
  %353 = vmatpush2.bf16.msra.mxu0 0
  %354 = vmatprep.subr.bf16.mxu0 0
  %355 = vmatpush2.bf16.msra.mxu0 0
  %356 = vmatprep.subr.bf16.mxu0 0
  %357 = vmatpush2.bf16.msra.mxu0 0
  %358 = vmatprep.mubr.bf16.mxu0 0
  %359 = vmatmul.mubr.bf16.gmra.mxu0 %v68
  %v360 = vpop.f32.mrf.mxu0
  %v361 = vadd.f32 %v114, %v360
  %v362 = vpop.f32.mrf.mxu0
  %v363 = vadd.f32 %v118, %v362
  %v364 = vpop.f32.mrf.mxu0
  %v365 = vadd.f32 %v114, %v364
  %v366 = vpop.f32.mrf.mxu0
  %v367 = vadd.f32 %v118, %v366
  %368 = vdwg.mxu0
  %v369 = vmax.f32 %v318, 0.0
  %v370 = vmax.f32 %v320, 0.0
  %v371 = vmax.f32 %v361, 0.0
  %v372 = vmax.f32 %v363, 0.0
  %v373 = vmax.f32 %v322, 0.0
  %v374 = vmax.f32 %v324, 0.0
  %v375 = vmax.f32 %v365, 0.0
  %v376 = vmax.f32 %v367, 0.0
  %v377 = vpack.c.bf16 %v373, %v369
  %v378 = vpack.c.bf16 %v374, %v370
  %v379 = vpack.c.bf16 %v375, %v371
  %v380 = vpack.c.bf16 %v376, %v372
  %v385 = vunpack.c.l.b16 %v377
  %v386 = vunpack.c.l.b16 %v378
  %v387 = vunpack.c.l.b16 %v379
  %v388 = vunpack.c.l.b16 %v380
  %v389 = vunpack.c.h.b16 %v377
  %v390 = vunpack.c.h.b16 %v378
  %v391 = vunpack.c.h.b16 %v379
  %v392 = vunpack.c.h.b16 %v380
  %v393 = vpack.c.b16 %v386, %v385
  %v394 = vpack.c.b16 %v388, %v387
  %v395 = vpack.c.b16 %v390, %v389
  %v396 = vpack.c.b16 %v392, %v391
  %401 = vst [vmem:[%s52] sm:$0xff] %v393
  %402 = vst [vmem:[%s52 + $0x8] sm:$0xff] %v394
  %403 = vst [vmem:[%s52 + $0x10] sm:$0xff] %v395
  %404 = vst [vmem:[%s52 + $0x18] sm:$0xff] %v396
  %s405 = sadd.s32 0, 0
  %s406 = sadd.s32 %s405, 1
  %s407 = smul.u32 %s406, 16
  %p408 = scmp.gt.s32.totalorder %s407, 8
  // Predicated region
  $region18: #{tabular_model_forward.5} parent=0 // pred_check
    %p409 = pneg %p408
  $region19: #{tabular_model_forward.5} parent=0 // pred_check_branch
    %411 = sbr.rel (%p409) target = $region21
  $region20: #{tabular_model_forward.5} parent=0 // pred_region
    %s412 = smul.u32 %s405, 16
    %v413 = vlaneseq
    %v414 = vshrl.u32 %v413, 7
    %v415 = vadd.s32 %v414, 8
    %v416 = vstv %s412
    %v417 = vadd.s32 %v416, %v414
    %v418 = vadd.s32 %v416, %v415
    %vm419 = vcmp.lt.s32.totalorder %v417, 8
    %vm420 = vcmp.lt.s32.totalorder %v418, 8
    %v421 = vsel %vm419, %v369, 0.0
    %v422 = vsel %vm419, %v370, 0.0
    %v423 = vsel %vm419, %v371, 0.0
    %v424 = vsel %vm419, %v372, 0.0
    %v425 = vsel %vm420, %v373, 0.0
    %v426 = vsel %vm420, %v374, 0.0
    %v427 = vsel %vm420, %v375, 0.0
    %v428 = vsel %vm420, %v376, 0.0
    %v429 = vld [vmem:[%s4] sm:$0xf]
    %v430 = vadd.f32 %v421, %v425
    %v431 = vrot.slane %v430, 4
    %v432 = vadd.f32 %v430, %v431
    %v433 = vrot.slane %v432, 2
    %v434 = vadd.f32 %v432, %v433
    %v435 = vrot.slane %v434, 1
    %v436 = vadd.f32 %v434, %v435
    %v437 = vadd.f32 %v422, %v426
    %v438 = vrot.slane %v437, 4
    %v439 = vadd.f32 %v437, %v438
    %v440 = vrot.slane %v439, 2
    %v441 = vadd.f32 %v439, %v440
    %v442 = vrot.slane %v441, 1
    %v443 = vadd.f32 %v441, %v442
    %v444 = vadd.f32 %v423, %v427
    %v445 = vrot.slane %v444, 4
    %v446 = vadd.f32 %v444, %v445
    %v447 = vrot.slane %v446, 2
    %v448 = vadd.f32 %v446, %v447
    %v449 = vrot.slane %v448, 1
    %v450 = vadd.f32 %v448, %v449
    %v451 = vadd.f32 %v424, %v428
    %v452 = vrot.slane %v451, 4
    %v453 = vadd.f32 %v451, %v452
    %v454 = vrot.slane %v453, 2
    %v455 = vadd.f32 %v453, %v454
    %v456 = vrot.slane %v455, 1
    %v457 = vadd.f32 %v455, %v456
    %v462 = vcombine.low %v436, %v443
    %v463 = vcombine.low %v450, %v457
    %v465 = vunpack.c.l.s4 1966171168
    %v466 = vunpack.c.0.s8 %v465
    %v467 = vlaneseq
    %v468 = vshrl.u32 %v467, 7
    %v469 = vsub.s32 %v466, %v468
    %v470 = vrot.slane %v462, %v469
    %v472 = vunpack.c.l.s4 1966171168
    %v473 = vunpack.c.0.s8 %v472
    %v474 = vlaneseq
    %v475 = vshrl.u32 %v474, 7
    %v476 = vsub.s32 %v473, %v475
    %v477 = vrot.slane %v463, %v476
    %v478 = vcombine.low %v470, %v477
    %v480 = vunpack.c.l.s4 1966171168
    %v481 = vunpack.c.0.s8 %v480
    %v482 = vlaneseq
    %v483 = vshrl.u32 %v482, 7
    %v484 = vsub.s32 %v481, %v483
    %v485 = vrot.slane %v478, %v484
    %v487 = vadd.f32 %v429, %v485
    %v488 = vlaneseq
    %vm489 = vcmp.ge.s32.totalorder %v488, 0
    %vm490 = vcmp.lt.s32.totalorder %v488, 512
    %vm491 = vmand %vm489, %vm490
    %492 = vst.msk [vmem:[%s4] sm:$0xf] %vm491, %v487
    %v493 = vld [vmem:[%s5] sm:$0xf]
    %v494 = vmul.f32 %v421, %v421
    %v495 = vmul.f32 %v422, %v422
    %v496 = vmul.f32 %v423, %v423
    %v497 = vmul.f32 %v424, %v424
    %v498 = vmul.f32 %v425, %v425
    %v499 = vmul.f32 %v426, %v426
    %v500 = vmul.f32 %v427, %v427
    %v501 = vmul.f32 %v428, %v428
    %v502 = vadd.f32 %v494, %v498
    %v503 = vrot.slane %v502, 4
    %v504 = vadd.f32 %v502, %v503
    %v505 = vrot.slane %v504, 2
    %v506 = vadd.f32 %v504, %v505
    %v507 = vrot.slane %v506, 1
    %v508 = vadd.f32 %v506, %v507
    %v509 = vadd.f32 %v495, %v499
    %v510 = vrot.slane %v509, 4
    %v511 = vadd.f32 %v509, %v510
    %v512 = vrot.slane %v511, 2
    %v513 = vadd.f32 %v511, %v512
    %v514 = vrot.slane %v513, 1
    %v515 = vadd.f32 %v513, %v514
    %v516 = vadd.f32 %v496, %v500
    %v517 = vrot.slane %v516, 4
    %v518 = vadd.f32 %v516, %v517
    %v519 = vrot.slane %v518, 2
    %v520 = vadd.f32 %v518, %v519
    %v521 = vrot.slane %v520, 1
    %v522 = vadd.f32 %v520, %v521
    %v523 = vadd.f32 %v497, %v501
    %v524 = vrot.slane %v523, 4
    %v525 = vadd.f32 %v523, %v524
    %v526 = vrot.slane %v525, 2
    %v527 = vadd.f32 %v525, %v526
    %v528 = vrot.slane %v527, 1
    %v529 = vadd.f32 %v527, %v528
    %v534 = vcombine.low %v508, %v515
    %v535 = vcombine.low %v522, %v529
    %v537 = vunpack.c.l.s4 1966171168
    %v538 = vunpack.c.0.s8 %v537
    %v539 = vlaneseq
    %v540 = vshrl.u32 %v539, 7
    %v541 = vsub.s32 %v538, %v540
    %v542 = vrot.slane %v534, %v541
    %v544 = vunpack.c.l.s4 1966171168
    %v545 = vunpack.c.0.s8 %v544
    %v546 = vlaneseq
    %v547 = vshrl.u32 %v546, 7
    %v548 = vsub.s32 %v545, %v547
    %v549 = vrot.slane %v535, %v548
    %v550 = vcombine.low %v542, %v549
    %v552 = vunpack.c.l.s4 1966171168
    %v553 = vunpack.c.0.s8 %v552
    %v554 = vlaneseq
    %v555 = vshrl.u32 %v554, 7
    %v556 = vsub.s32 %v553, %v555
    %v557 = vrot.slane %v550, %v556
    %v559 = vadd.f32 %v493, %v557
    %560 = vst.msk [vmem:[%s5] sm:$0xf] %vm491, %v559
  $region21: #{tabular_model_forward.5} parent=0 // pred_fallthru
    _
  %p561 = scmp.le.s32.totalorder %s407, 8
  // Predicated region
  $region22: #{tabular_model_forward.5} parent=0 // pred_check
    %p562 = pneg %p561
  $region23: #{tabular_model_forward.5} parent=0 // pred_check_branch
    %564 = sbr.rel (%p562) target = $region25
  $region24: #{tabular_model_forward.5} parent=0 // pred_region
    %v565 = vld [vmem:[%s4] sm:$0xf]
    %v566 = vadd.f32 %v369, %v373
    %v567 = vrot.slane %v566, 4
    %v568 = vadd.f32 %v566, %v567
    %v569 = vrot.slane %v568, 2
    %v570 = vadd.f32 %v568, %v569
    %v571 = vrot.slane %v570, 1
    %v572 = vadd.f32 %v570, %v571
    %v573 = vadd.f32 %v370, %v374
    %v574 = vrot.slane %v573, 4
    %v575 = vadd.f32 %v573, %v574
    %v576 = vrot.slane %v575, 2
    %v577 = vadd.f32 %v575, %v576
    %v578 = vrot.slane %v577, 1
    %v579 = vadd.f32 %v577, %v578
    %v580 = vadd.f32 %v371, %v375
    %v581 = vrot.slane %v580, 4
    %v582 = vadd.f32 %v580, %v581
    %v583 = vrot.slane %v582, 2
    %v584 = vadd.f32 %v582, %v583
    %v585 = vrot.slane %v584, 1
    %v586 = vadd.f32 %v584, %v585
    %v587 = vadd.f32 %v372, %v376
    %v588 = vrot.slane %v587, 4
    %v589 = vadd.f32 %v587, %v588
    %v590 = vrot.slane %v589, 2
    %v591 = vadd.f32 %v589, %v590
    %v592 = vrot.slane %v591, 1
    %v593 = vadd.f32 %v591, %v592
    %v598 = vcombine.low %v572, %v579
    %v599 = vcombine.low %v586, %v593
    %v601 = vunpack.c.l.s4 1966171168
    %v602 = vunpack.c.0.s8 %v601
    %v603 = vlaneseq
    %v604 = vshrl.u32 %v603, 7
    %v605 = vsub.s32 %v602, %v604
    %v606 = vrot.slane %v598, %v605
    %v608 = vunpack.c.l.s4 1966171168
    %v609 = vunpack.c.0.s8 %v608
    %v610 = vlaneseq
    %v611 = vshrl.u32 %v610, 7
    %v612 = vsub.s32 %v609, %v611
    %v613 = vrot.slane %v599, %v612
    %v614 = vcombine.low %v606, %v613
    %v616 = vunpack.c.l.s4 1966171168
    %v617 = vunpack.c.0.s8 %v616
    %v618 = vlaneseq
    %v619 = vshrl.u32 %v618, 7
    %v620 = vsub.s32 %v617, %v619
    %v621 = vrot.slane %v614, %v620
    %v623 = vadd.f32 %v565, %v621
    %v624 = vlaneseq
    %vm625 = vcmp.ge.s32.totalorder %v624, 0
    %vm626 = vcmp.lt.s32.totalorder %v624, 512
    %vm627 = vmand %vm625, %vm626
    %628 = vst.msk [vmem:[%s4] sm:$0xf] %vm627, %v623
    %v629 = vld [vmem:[%s5] sm:$0xf]
    %v630 = vmul.f32 %v369, %v369
    %v631 = vmul.f32 %v370, %v370
    %v632 = vmul.f32 %v371, %v371
    %v633 = vmul.f32 %v372, %v372
    %v634 = vmul.f32 %v373, %v373
    %v635 = vmul.f32 %v374, %v374
    %v636 = vmul.f32 %v375, %v375
    %v637 = vmul.f32 %v376, %v376
    %v638 = vadd.f32 %v630, %v634
    %v639 = vrot.slane %v638, 4
    %v640 = vadd.f32 %v638, %v639
    %v641 = vrot.slane %v640, 2
    %v642 = vadd.f32 %v640, %v641
    %v643 = vrot.slane %v642, 1
    %v644 = vadd.f32 %v642, %v643
    %v645 = vadd.f32 %v631, %v635
    %v646 = vrot.slane %v645, 4
    %v647 = vadd.f32 %v645, %v646
    %v648 = vrot.slane %v647, 2
    %v649 = vadd.f32 %v647, %v648
    %v650 = vrot.slane %v649, 1
    %v651 = vadd.f32 %v649, %v650
    %v652 = vadd.f32 %v632, %v636
    %v653 = vrot.slane %v652, 4
    %v654 = vadd.f32 %v652, %v653
    %v655 = vrot.slane %v654, 2
    %v656 = vadd.f32 %v654, %v655
    %v657 = vrot.slane %v656, 1
    %v658 = vadd.f32 %v656, %v657
    %v659 = vadd.f32 %v633, %v637
    %v660 = vrot.slane %v659, 4
    %v661 = vadd.f32 %v659, %v660
    %v662 = vrot.slane %v661, 2
    %v663 = vadd.f32 %v661, %v662
    %v664 = vrot.slane %v663, 1
    %v665 = vadd.f32 %v663, %v664
    %v670 = vcombine.low %v644, %v651
    %v671 = vcombine.low %v658, %v665
    %v673 = vunpack.c.l.s4 1966171168
    %v674 = vunpack.c.0.s8 %v673
    %v675 = vlaneseq
    %v676 = vshrl.u32 %v675, 7
    %v677 = vsub.s32 %v674, %v676
    %v678 = vrot.slane %v670, %v677
    %v680 = vunpack.c.l.s4 1966171168
    %v681 = vunpack.c.0.s8 %v680
    %v682 = vlaneseq
    %v683 = vshrl.u32 %v682, 7
    %v684 = vsub.s32 %v681, %v683
    %v685 = vrot.slane %v671, %v684
    %v686 = vcombine.low %v678, %v685
    %v688 = vunpack.c.l.s4 1966171168
    %v689 = vunpack.c.0.s8 %v688
    %v690 = vlaneseq
    %v691 = vshrl.u32 %v690, 7
    %v692 = vsub.s32 %v689, %v691
    %v693 = vrot.slane %v686, %v692
    %v695 = vadd.f32 %v629, %v693
    %696 = vst.msk [vmem:[%s5] sm:$0xf] %vm627, %v695
  $region25: #{tabular_model_forward.5} parent=0 // pred_fallthru
    _
  %s697 = sadd.s32 0, 0
  %s698 = smul.u32 2, %s697
  %p699 = scmp.lt.s32.totalorder %s698, 1
  %s700 = scalar_select %p699, %s698, 1
  %s701 = smul.addr %s700, 4
  %s702 = smul.addr %s701, 4
  %s703 = scalar_lea.vmem %s3, %s702
  // Predicated region
  $region26: #{tabular_model_forward.5} parent=0 // pred_check
    _
  $region27: #{tabular_model_forward.5} parent=0 // pred_check_branch
    %705 = sbr.rel (0) target = $region29
  $region28: #{tabular_model_forward.5} parent=0 // pred_region
    %s706 = sadd.s32 0, 0
    %s707 = smul.u32 2, %s706
  $region29: #{tabular_model_forward.5} parent=0 // pred_fallthru
    _
  // Predicated region
  $region30: #{tabular_model_forward.5} parent=0 // pred_check
    _
  $region31: #{tabular_model_forward.5} parent=0 // pred_check_branch
    %709 = sbr.rel (0) target = $region33
  $region32: #{tabular_model_forward.5} parent=0 // pred_region
    _
  $region33: #{tabular_model_forward.5} parent=0 // pred_fallthru
    _
  // Predicated region
  $region34: #{tabular_model_forward.5} parent=0 // pred_check
    _
  $region35: #{tabular_model_forward.5} parent=0 // pred_check_branch
    %711 = sbr.rel (0) target = $region37
  $region36: #{tabular_model_forward.5} parent=0 // pred_region
    _
  $region37: #{tabular_model_forward.5} parent=0 // pred_fallthru
    _
  // Predicated region
  $region38: #{tabular_model_forward.5} parent=0 // pred_check
    _
  $region39: #{tabular_model_forward.5} parent=0 // pred_check_branch
    %713 = sbr.rel (0) target = $region41
  $region40: #{tabular_model_forward.5} parent=0 // pred_region
    %s714 = sadd.s32 0, 0
    %s715 = smul.u32 2, %s714
    %p716 = scmp.lt.s32.totalorder %s715, 1
    %s717 = scalar_select %p716, %s715, 1
    %s718 = smul.addr %s717, 4
    %s719 = smul.addr %s718, 4
    %s720 = scalar_lea.vmem %s3, %s719
  $region41: #{tabular_model_forward.5} parent=0 // pred_fallthru
    _
  // Predicated region
  $region42: #{tabular_model_forward.5} parent=0 // pred_check
    _
  $region43: #{tabular_model_forward.5} parent=0 // pred_check_branch
    %722 = sbr.rel (0) target = $region45
  $region44: #{tabular_model_forward.5} parent=0 // pred_region
    _
  $region45: #{tabular_model_forward.5} parent=0 // pred_fallthru
    _
  // Predicated region
  $region46: #{tabular_model_forward.5} parent=0 // pred_check
    _
  $region47: #{tabular_model_forward.5} parent=0 // pred_check_branch
    %724 = sbr.rel (0) target = $region49
  $region48: #{tabular_model_forward.5} parent=0 // pred_region
    _
  $region49: #{tabular_model_forward.5} parent=0 // pred_fallthru
    _

// kernel: tabular_model_forward.7
$region0: #{tabular_model_forward.7}
  #allocation0 [shape = 'u32[]', space=smem, size = 0x4, offset = 0x4, fixed_abs, tag = 'smem constant byte address 0x4 - core index']
  #allocation1 [shape = 'u32[144,128]{1,0:T(1,128)}', space=vmem, size = 0x12000, scoped, tag = 'internal scratch']
  %s0 = inlined_call_operand.vmem [shape: bf16[16,128], index: 0, kind: input, shape index: {}]
  %s1 = inlined_call_operand.vmem [shape: bf16[128,128], index: 1, kind: input, shape index: {}]
  %s2 = inlined_call_operand.vmem [shape: f32[1,128], index: 2, kind: input, shape index: {}]
  %s3 = inlined_call_operand.vmem [shape: f32[16,128], index: 3, kind: output, shape index: {}]
  %s4 = sld [smem:[#allocation0]]
  $region22: #{tabular_model_forward.7} parent=0
    _
  %s6 = ssub.s32 1, %s4
  %s7 = scalar_select 0, %s6, %s4
  // Predicated region
  $region2: #{tabular_model_forward.7} parent=0 // pred_check
    _
  $region3: #{tabular_model_forward.7} parent=0 // pred_check_branch
    %9 = sbr.rel (0) target = $region5
  $region4: #{tabular_model_forward.7} parent=0 // pred_region
    _
  $region5: #{tabular_model_forward.7} parent=0 // pred_fallthru
    _
  // Predicated region
  $region6: #{tabular_model_forward.7} parent=0 // pred_check
    _
  $region7: #{tabular_model_forward.7} parent=0 // pred_check_branch
    %11 = sbr.rel (0) target = $region9
  $region8: #{tabular_model_forward.7} parent=0 // pred_region
    _
  $region9: #{tabular_model_forward.7} parent=0 // pred_fallthru
    _
  // Predicated region
  $region10: #{tabular_model_forward.7} parent=0 // pred_check
    _
  $region11: #{tabular_model_forward.7} parent=0 // pred_check_branch
    %13 = sbr.rel (0) target = $region13
  $region12: #{tabular_model_forward.7} parent=0 // pred_region
    _
  $region13: #{tabular_model_forward.7} parent=0 // pred_fallthru
    _
  %v15 = vld [vmem:[%s0] sm:$0xf]
  %v16 = vld [vmem:[%s0 + $0x4] sm:$0xf]
  %v17 = vld [vmem:[%s1] sm:$0xf]
  %v18 = vld [vmem:[%s1 + $0x4] sm:$0xf]
  %v19 = vld [vmem:[%s1 + $0x8] sm:$0xf]
  %v20 = vld [vmem:[%s1 + $0xc] sm:$0xf]
  %v21 = vld [vmem:[%s1 + $0x10] sm:$0xf]
  %v22 = vld [vmem:[%s1 + $0x14] sm:$0xf]
  %v23 = vld [vmem:[%s1 + $0x18] sm:$0xf]
  %v24 = vld [vmem:[%s1 + $0x1c] sm:$0xf]
  %v25 = vld [vmem:[%s1 + $0x20] sm:$0xf]
  %v26 = vld [vmem:[%s1 + $0x24] sm:$0xf]
  %v27 = vld [vmem:[%s1 + $0x28] sm:$0xf]
  %v28 = vld [vmem:[%s1 + $0x2c] sm:$0xf]
  %v29 = vld [vmem:[%s1 + $0x30] sm:$0xf]
  %v30 = vld [vmem:[%s1 + $0x34] sm:$0xf]
  %v31 = vld [vmem:[%s1 + $0x38] sm:$0xf]
  %v32 = vld [vmem:[%s1 + $0x3c] sm:$0xf]
  %v33 = vld [vmem:[%s2] sm:$0x1]
  %v35 = vlaneseq
  %v36 = vshrl.u32 %v35, 7
  %v37 = vsub.s32 0, %v36
  %v38 = vrot.slane %v33, %v37
  %v42 = vunpack.c.l.b16 %v15
  %v43 = vunpack.c.l.b16 %v16
  %v44 = vpack.c.b16 %v43, %v42
  %v62 = vunpack.c.l.b16 %v17
  %v63 = vunpack.c.l.b16 %v18
  %v64 = vunpack.c.l.b16 %v19
  %v65 = vunpack.c.l.b16 %v20
  %v66 = vunpack.c.l.b16 %v21
  %v67 = vunpack.c.l.b16 %v22
  %v68 = vunpack.c.l.b16 %v23
  %v69 = vunpack.c.l.b16 %v24
  %v70 = vunpack.c.l.b16 %v25
  %v71 = vunpack.c.l.b16 %v26
  %v72 = vunpack.c.l.b16 %v27
  %v73 = vunpack.c.l.b16 %v28
  %v74 = vunpack.c.l.b16 %v29
  %v75 = vunpack.c.l.b16 %v30
  %v76 = vunpack.c.l.b16 %v31
  %v77 = vunpack.c.l.b16 %v32
  %v78 = vpack.c.b16 %v63, %v62
  %v79 = vpack.c.b16 %v65, %v64
  %v80 = vpack.c.b16 %v67, %v66
  %v81 = vpack.c.b16 %v69, %v68
  %v82 = vpack.c.b16 %v71, %v70
  %v83 = vpack.c.b16 %v73, %v72
  %v84 = vpack.c.b16 %v75, %v74
  %v85 = vpack.c.b16 %v77, %v76
  %94 = vmatprep.subr.bf16.mxu0 0
  %95 = vmatpush1.bf16.msra.mxu0 %v85
  %96 = vmatprep.subr.bf16.mxu0 0
  %97 = vmatpush1.bf16.msra.mxu0 %v84
  %98 = vmatprep.subr.bf16.mxu0 0
  %99 = vmatpush1.bf16.msra.mxu0 %v83
  %100 = vmatprep.subr.bf16.mxu0 0
  %101 = vmatpush1.bf16.msra.mxu0 %v82
  %102 = vmatprep.subr.bf16.mxu0 0
  %103 = vmatpush1.bf16.msra.mxu0 %v81
  %104 = vmatprep.subr.bf16.mxu0 0
  %105 = vmatpush1.bf16.msra.mxu0 %v80
  %106 = vmatprep.subr.bf16.mxu0 0
  %107 = vmatpush1.bf16.msra.mxu0 %v79
  %108 = vmatprep.subr.bf16.mxu0 0
  %109 = vmatpush1.bf16.msra.mxu0 %v78
  %110 = vmatprep.subr.bf16.mxu0 0
  %111 = vmatpush2.bf16.msra.mxu0 0
  %112 = vmatprep.subr.bf16.mxu0 0
  %113 = vmatpush2.bf16.msra.mxu0 0
  %114 = vmatprep.subr.bf16.mxu0 0
  %115 = vmatpush2.bf16.msra.mxu0 0
  %116 = vmatprep.subr.bf16.mxu0 0
  %117 = vmatpush2.bf16.msra.mxu0 0
  %118 = vmatprep.subr.bf16.mxu0 0
  %119 = vmatpush2.bf16.msra.mxu0 0
  %120 = vmatprep.subr.bf16.mxu0 0
  %121 = vmatpush2.bf16.msra.mxu0 0
  %122 = vmatprep.subr.bf16.mxu0 0
  %123 = vmatpush2.bf16.msra.mxu0 0
  %124 = vmatprep.subr.bf16.mxu0 0
  %125 = vmatpush2.bf16.msra.mxu0 0
  %126 = vmatprep.mubr.bf16.mxu0 0
  %127 = vmatmul.mubr.bf16.gmra.mxu0 %v44
  %v128 = vpop.f32.mrf.mxu0
  %v129 = vadd.f32 %v38, %v128
  %v130 = vpop.f32.mrf.mxu0
  %v131 = vpop.f32.mrf.mxu0
  %v132 = vadd.f32 %v38, %v131
  %v133 = vpop.f32.mrf.mxu0
  %134 = vdwg.mxu0
  %135 = vst [vmem:[%s3] sm:$0xff] %v129
  %136 = vst [vmem:[%s3 + $0x8] sm:$0xff] %v132
  // Predicated region
  $region14: #{tabular_model_forward.7} parent=0 // pred_check
    _
  $region15: #{tabular_model_forward.7} parent=0 // pred_check_branch
    %138 = sbr.rel (0) target = $region17
  $region16: #{tabular_model_forward.7} parent=0 // pred_region
    _
  $region17: #{tabular_model_forward.7} parent=0 // pred_fallthru
    _
  // Predicated region
  $region18: #{tabular_model_forward.7} parent=0 // pred_check
    _
  $region19: #{tabular_model_forward.7} parent=0 // pred_check_branch
    %140 = sbr.rel (0) target = $region21
  $region20: #{tabular_model_forward.7} parent=0 // pred_region
    _
  $region21: #{tabular_model_forward.7} parent=0 // pred_fallthru
    _

// kernel: tabular_model_forward.6
$region0: #{tabular_model_forward.6}
  #allocation0 [shape = 'u32[]', space=smem, size = 0x4, offset = 0x4, fixed_abs, tag = 'smem constant byte address 0x4 - core index']
  #allocation1 [shape = 'u32[144,128]{1,0:T(1,128)}', space=vmem, size = 0x12000, scoped, tag = 'internal scratch']
  %s0 = inlined_call_operand.vmem [shape: bf16[16,512], index: 0, kind: input, shape index: {}]
  %s1 = inlined_call_operand.vmem [shape: bf16[512,128], index: 1, kind: input, shape index: {}]
  %s2 = inlined_call_operand.vmem [shape: f32[1,128], index: 2, kind: input, shape index: {}]
  %s3 = inlined_call_operand.vmem [shape: bf16[16,128], index: 3, kind: output, shape index: {0}]
  %s4 = inlined_call_operand.vmem [shape: f32[1,1,128], index: 4, kind: output, shape index: {1}]
  %s5 = inlined_call_operand.vmem [shape: f32[1,1,128], index: 5, kind: output, shape index: {2}]
  %6 = xla_tuple %s3, %s4, %s5
  %s7 = sld [smem:[#allocation0]]
  $region50: #{tabular_model_forward.6} parent=0
    _
  %s9 = ssub.s32 1, %s7
  %s10 = scalar_select 0, %s9, %s7
  // Predicated region
  $region2: #{tabular_model_forward.6} parent=0 // pred_check
    _
  $region3: #{tabular_model_forward.6} parent=0 // pred_check_branch
    %12 = sbr.rel (0) target = $region5
  $region4: #{tabular_model_forward.6} parent=0 // pred_region
    %s13 = sadd.s32 0, 0
    %s14 = smul.u32 2, %s13
    %p15 = scmp.lt.s32.totalorder %s14, 1
    %s16 = scalar_select %p15, %s14, 1
    %s17 = smul.addr %s16, 4
    %s18 = smul.addr %s17, 4
    %s19 = scalar_lea.vmem %s0, %s18
    %s20 = sadd.s32 0, 0
    %s21 = smul.u32 2, %s20
  $region5: #{tabular_model_forward.6} parent=0 // pred_fallthru
    _
  // Predicated region
  $region6: #{tabular_model_forward.6} parent=0 // pred_check
    _
  $region7: #{tabular_model_forward.6} parent=0 // pred_check_branch
    %23 = sbr.rel (0) target = $region9
  $region8: #{tabular_model_forward.6} parent=0 // pred_region
    _
  $region9: #{tabular_model_forward.6} parent=0 // pred_fallthru
    _
  // Predicated region
  $region10: #{tabular_model_forward.6} parent=0 // pred_check
    _
  $region11: #{tabular_model_forward.6} parent=0 // pred_check_branch
    %25 = sbr.rel (0) target = $region13
  $region12: #{tabular_model_forward.6} parent=0 // pred_region
    _
  $region13: #{tabular_model_forward.6} parent=0 // pred_fallthru
    _
  %s26 = sadd.s32 0, 0
  %s27 = smul.u32 2, %s26
  %p28 = scmp.lt.s32.totalorder %s27, 1
  %s29 = scalar_select %p28, %s27, 1
  %s30 = smul.addr %s29, 4
  %s31 = smul.addr %s30, 4
  %s32 = scalar_lea.vmem %s0, %s31
  %s33 = sadd.s32 0, 0
  %s34 = smul.u32 2, %s33
  %p35 = scmp.lt.s32.totalorder %s34, 1
  %s36 = scalar_select %p35, %s34, 1
  %s37 = smul.addr %s36, 4
  %s38 = scalar_lea.vmem %s3, %s37
  %s39 = sadd.s32 0, 0
  %s40 = smul.u32 2, %s39
  %p41 = scmp.lt.s32.totalorder %s40, 1
  %s42 = scalar_select %p41, %s40, 1
  %s43 = smul.addr %s42, 4
  %s44 = smul.addr %s43, 4
  %s45 = scalar_lea.vmem %s0, %s44
  %s46 = sadd.s32 0, 0
  %s47 = smul.u32 2, %s46
  %s48 = sadd.s32 0, 0
  %s49 = smul.u32 2, %s48
  %p50 = scmp.lt.s32.totalorder %s49, 1
  %s51 = scalar_select %p50, %s49, 1
  %s52 = smul.addr %s51, 4
  %s53 = scalar_lea.vmem %s3, %s52
  %s54 = sadd.s32 0, 0
  %s55 = smul.u32 2, %s54
  %p57 = scmp.eq.s32.totalorder 0, 0
  // Predicated region
  $region14: #{tabular_model_forward.6} parent=0 // pred_check
    %p58 = pneg %p57
  $region15: #{tabular_model_forward.6} parent=0 // pred_check_branch
    %60 = sbr.rel (%p58) target = $region17
  $region16: #{tabular_model_forward.6} parent=0 // pred_region
    %61 = vst [vmem:[%s4] sm:$0x1] 0.0
    %62 = vst [vmem:[%s5] sm:$0x1] 0.0
  $region17: #{tabular_model_forward.6} parent=0 // pred_fallthru
    _
  %v63 = vld [vmem:[%s45] sm:$0xff]
  %v64 = vld [vmem:[%s45 + $0x8] sm:$0xff]
  %v65 = vld [vmem:[%s45 + $0x10] sm:$0xff]
  %v66 = vld [vmem:[%s45 + $0x18] sm:$0xff]
  %v67 = vld [vmem:[%s1] sm:$0xf]
  %v68 = vld [vmem:[%s1 + $0x4] sm:$0xf]
  %v69 = vld [vmem:[%s1 + $0x8] sm:$0xf]
  %v70 = vld [vmem:[%s1 + $0xc] sm:$0xf]
  %v71 = vld [vmem:[%s1 + $0x10] sm:$0xf]
  %v72 = vld [vmem:[%s1 + $0x14] sm:$0xf]
  %v73 = vld [vmem:[%s1 + $0x18] sm:$0xf]
  %v74 = vld [vmem:[%s1 + $0x1c] sm:$0xf]
  %v75 = vld [vmem:[%s1 + $0x20] sm:$0xf]
  %v76 = vld [vmem:[%s1 + $0x24] sm:$0xf]
  %v77 = vld [vmem:[%s1 + $0x28] sm:$0xf]
  %v78 = vld [vmem:[%s1 + $0x2c] sm:$0xf]
  %v79 = vld [vmem:[%s1 + $0x30] sm:$0xf]
  %v80 = vld [vmem:[%s1 + $0x34] sm:$0xf]
  %v81 = vld [vmem:[%s1 + $0x38] sm:$0xf]
  %v82 = vld [vmem:[%s1 + $0x3c] sm:$0xf]
  %v83 = vld [vmem:[%s1 + $0x40] sm:$0xf]
  %v84 = vld [vmem:[%s1 + $0x44] sm:$0xf]
  %v85 = vld [vmem:[%s1 + $0x48] sm:$0xf]
  %v86 = vld [vmem:[%s1 + $0x4c] sm:$0xf]
  %v87 = vld [vmem:[%s1 + $0x50] sm:$0xf]
  %v88 = vld [vmem:[%s1 + $0x54] sm:$0xf]
  %v89 = vld [vmem:[%s1 + $0x58] sm:$0xf]
  %v90 = vld [vmem:[%s1 + $0x5c] sm:$0xf]
  %v91 = vld [vmem:[%s1 + $0x60] sm:$0xf]
  %v92 = vld [vmem:[%s1 + $0x64] sm:$0xf]
  %v93 = vld [vmem:[%s1 + $0x68] sm:$0xf]
  %v94 = vld [vmem:[%s1 + $0x6c] sm:$0xf]
  %v95 = vld [vmem:[%s1 + $0x70] sm:$0xf]
  %v96 = vld [vmem:[%s1 + $0x74] sm:$0xf]
  %v97 = vld [vmem:[%s1 + $0x78] sm:$0xf]
  %v98 = vld [vmem:[%s1 + $0x7c] sm:$0xf]
  %v99 = vld [vmem:[%s1 + $0x80] sm:$0xf]
  %v100 = vld [vmem:[%s1 + $0x84] sm:$0xf]
  %v101 = vld [vmem:[%s1 + $0x88] sm:$0xf]
  %v102 = vld [vmem:[%s1 + $0x8c] sm:$0xf]
  %v103 = vld [vmem:[%s1 + $0x90] sm:$0xf]
  %v104 = vld [vmem:[%s1 + $0x94] sm:$0xf]
  %v105 = vld [vmem:[%s1 + $0x98] sm:$0xf]
  %v106 = vld [vmem:[%s1 + $0x9c] sm:$0xf]
  %v107 = vld [vmem:[%s1 + $0xa0] sm:$0xf]
  %v108 = vld [vmem:[%s1 + $0xa4] sm:$0xf]
  %v109 = vld [vmem:[%s1 + $0xa8] sm:$0xf]
  %v110 = vld [vmem:[%s1 + $0xac] sm:$0xf]
  %v111 = vld [vmem:[%s1 + $0xb0] sm:$0xf]
  %v112 = vld [vmem:[%s1 + $0xb4] sm:$0xf]
  %v113 = vld [vmem:[%s1 + $0xb8] sm:$0xf]
  %v114 = vld [vmem:[%s1 + $0xbc] sm:$0xf]
  %v115 = vld [vmem:[%s1 + $0xc0] sm:$0xf]
  %v116 = vld [vmem:[%s1 + $0xc4] sm:$0xf]
  %v117 = vld [vmem:[%s1 + $0xc8] sm:$0xf]
  %v118 = vld [vmem:[%s1 + $0xcc] sm:$0xf]
  %v119 = vld [vmem:[%s1 + $0xd0] sm:$0xf]
  %v120 = vld [vmem:[%s1 + $0xd4] sm:$0xf]
  %v121 = vld [vmem:[%s1 + $0xd8] sm:$0xf]
  %v122 = vld [vmem:[%s1 + $0xdc] sm:$0xf]
  %v123 = vld [vmem:[%s1 + $0xe0] sm:$0xf]
  %v124 = vld [vmem:[%s1 + $0xe4] sm:$0xf]
  %v125 = vld [vmem:[%s1 + $0xe8] sm:$0xf]
  %v126 = vld [vmem:[%s1 + $0xec] sm:$0xf]
  %v127 = vld [vmem:[%s1 + $0xf0] sm:$0xf]
  %v128 = vld [vmem:[%s1 + $0xf4] sm:$0xf]
  %v129 = vld [vmem:[%s1 + $0xf8] sm:$0xf]
  %v130 = vld [vmem:[%s1 + $0xfc] sm:$0xf]
  %v131 = vld [vmem:[%s2] sm:$0x1]
  %v133 = vlaneseq
  %v134 = vshrl.u32 %v133, 7
  %v135 = vsub.s32 0, %v134
  %v136 = vrot.slane %v131, %v135
  %v142 = vunpack.c.l.b16 %v63
  %v143 = vunpack.c.h.b16 %v63
  %v144 = vunpack.c.l.b16 %v64
  %v145 = vunpack.c.h.b16 %v64
  %v146 = vunpack.c.l.b16 %v65
  %v147 = vunpack.c.h.b16 %v65
  %v148 = vunpack.c.l.b16 %v66
  %v149 = vunpack.c.h.b16 %v66
  %v150 = vpack.c.b16 %v146, %v142
  %v151 = vpack.c.b16 %v147, %v143
  %v152 = vpack.c.b16 %v148, %v144
  %v153 = vpack.c.b16 %v149, %v145
  %v222 = vunpack.c.l.b16 %v67
  %v223 = vunpack.c.l.b16 %v68
  %v224 = vunpack.c.l.b16 %v69
  %v225 = vunpack.c.l.b16 %v70
  %v226 = vunpack.c.l.b16 %v71
  %v227 = vunpack.c.l.b16 %v72
  %v228 = vunpack.c.l.b16 %v73
  %v229 = vunpack.c.l.b16 %v74
  %v230 = vunpack.c.l.b16 %v75
  %v231 = vunpack.c.l.b16 %v76
  %v232 = vunpack.c.l.b16 %v77
  %v233 = vunpack.c.l.b16 %v78
  %v234 = vunpack.c.l.b16 %v79
  %v235 = vunpack.c.l.b16 %v80
  %v236 = vunpack.c.l.b16 %v81
  %v237 = vunpack.c.l.b16 %v82
  %v238 = vunpack.c.l.b16 %v83
  %v239 = vunpack.c.l.b16 %v84
  %v240 = vunpack.c.l.b16 %v85
  %v241 = vunpack.c.l.b16 %v86
  %v242 = vunpack.c.l.b16 %v87
  %v243 = vunpack.c.l.b16 %v88
  %v244 = vunpack.c.l.b16 %v89
  %v245 = vunpack.c.l.b16 %v90
  %v246 = vunpack.c.l.b16 %v91
  %v247 = vunpack.c.l.b16 %v92
  %v248 = vunpack.c.l.b16 %v93
  %v249 = vunpack.c.l.b16 %v94
  %v250 = vunpack.c.l.b16 %v95
  %v251 = vunpack.c.l.b16 %v96
  %v252 = vunpack.c.l.b16 %v97
  %v253 = vunpack.c.l.b16 %v98
  %v254 = vunpack.c.l.b16 %v99
  %v255 = vunpack.c.l.b16 %v100
  %v256 = vunpack.c.l.b16 %v101
  %v257 = vunpack.c.l.b16 %v102
  %v258 = vunpack.c.l.b16 %v103
  %v259 = vunpack.c.l.b16 %v104
  %v260 = vunpack.c.l.b16 %v105
  %v261 = vunpack.c.l.b16 %v106
  %v262 = vunpack.c.l.b16 %v107
  %v263 = vunpack.c.l.b16 %v108
  %v264 = vunpack.c.l.b16 %v109
  %v265 = vunpack.c.l.b16 %v110
  %v266 = vunpack.c.l.b16 %v111
  %v267 = vunpack.c.l.b16 %v112
  %v268 = vunpack.c.l.b16 %v113
  %v269 = vunpack.c.l.b16 %v114
  %v270 = vunpack.c.l.b16 %v115
  %v271 = vunpack.c.l.b16 %v116
  %v272 = vunpack.c.l.b16 %v117
  %v273 = vunpack.c.l.b16 %v118
  %v274 = vunpack.c.l.b16 %v119
  %v275 = vunpack.c.l.b16 %v120
  %v276 = vunpack.c.l.b16 %v121
  %v277 = vunpack.c.l.b16 %v122
  %v278 = vunpack.c.l.b16 %v123
  %v279 = vunpack.c.l.b16 %v124
  %v280 = vunpack.c.l.b16 %v125
  %v281 = vunpack.c.l.b16 %v126
  %v282 = vunpack.c.l.b16 %v127
  %v283 = vunpack.c.l.b16 %v128
  %v284 = vunpack.c.l.b16 %v129
  %v285 = vunpack.c.l.b16 %v130
  %v286 = vpack.c.b16 %v223, %v222
  %v287 = vpack.c.b16 %v225, %v224
  %v288 = vpack.c.b16 %v227, %v226
  %v289 = vpack.c.b16 %v229, %v228
  %v290 = vpack.c.b16 %v231, %v230
  %v291 = vpack.c.b16 %v233, %v232
  %v292 = vpack.c.b16 %v235, %v234
  %v293 = vpack.c.b16 %v237, %v236
  %v294 = vpack.c.b16 %v239, %v238
  %v295 = vpack.c.b16 %v241, %v240
  %v296 = vpack.c.b16 %v243, %v242
  %v297 = vpack.c.b16 %v245, %v244
  %v298 = vpack.c.b16 %v247, %v246
  %v299 = vpack.c.b16 %v249, %v248
  %v300 = vpack.c.b16 %v251, %v250
  %v301 = vpack.c.b16 %v253, %v252
  %v302 = vpack.c.b16 %v255, %v254
  %v303 = vpack.c.b16 %v257, %v256
  %v304 = vpack.c.b16 %v259, %v258
  %v305 = vpack.c.b16 %v261, %v260
  %v306 = vpack.c.b16 %v263, %v262
  %v307 = vpack.c.b16 %v265, %v264
  %v308 = vpack.c.b16 %v267, %v266
  %v309 = vpack.c.b16 %v269, %v268
  %v310 = vpack.c.b16 %v271, %v270
  %v311 = vpack.c.b16 %v273, %v272
  %v312 = vpack.c.b16 %v275, %v274
  %v313 = vpack.c.b16 %v277, %v276
  %v314 = vpack.c.b16 %v279, %v278
  %v315 = vpack.c.b16 %v281, %v280
  %v316 = vpack.c.b16 %v283, %v282
  %v317 = vpack.c.b16 %v285, %v284
  %350 = vmatprep.subr.bf16.mxu0 0
  %351 = vmatpush1.bf16.msra.mxu0 %v293
  %352 = vmatprep.subr.bf16.mxu0 0
  %353 = vmatpush1.bf16.msra.mxu0 %v292
  %354 = vmatprep.subr.bf16.mxu0 0
  %355 = vmatpush1.bf16.msra.mxu0 %v291
  %356 = vmatprep.subr.bf16.mxu0 0
  %357 = vmatpush1.bf16.msra.mxu0 %v290
  %358 = vmatprep.subr.bf16.mxu0 0
  %359 = vmatpush1.bf16.msra.mxu0 %v289
  %360 = vmatprep.subr.bf16.mxu0 0
  %361 = vmatpush1.bf16.msra.mxu0 %v288
  %362 = vmatprep.subr.bf16.mxu0 0
  %363 = vmatpush1.bf16.msra.mxu0 %v287
  %364 = vmatprep.subr.bf16.mxu0 0
  %365 = vmatpush1.bf16.msra.mxu0 %v286
  %366 = vmatprep.subr.bf16.mxu0 0
  %367 = vmatpush2.bf16.msra.mxu0 %v301
  %368 = vmatprep.subr.bf16.mxu0 0
  %369 = vmatpush2.bf16.msra.mxu0 %v300
  %370 = vmatprep.subr.bf16.mxu0 0
  %371 = vmatpush2.bf16.msra.mxu0 %v299
  %372 = vmatprep.subr.bf16.mxu0 0
  %373 = vmatpush2.bf16.msra.mxu0 %v298
  %374 = vmatprep.subr.bf16.mxu0 0
  %375 = vmatpush2.bf16.msra.mxu0 %v297
  %376 = vmatprep.subr.bf16.mxu0 0
  %377 = vmatpush2.bf16.msra.mxu0 %v296
  %378 = vmatprep.subr.bf16.mxu0 0
  %379 = vmatpush2.bf16.msra.mxu0 %v295
  %380 = vmatprep.subr.bf16.mxu0 0
  %381 = vmatpush2.bf16.msra.mxu0 %v294
  %382 = vmatprep.mubr.bf16.mxu0 %v151
  %383 = vmatmul.mubr.bf16.gmra.mxu0 %v150
  %v384 = vpop.f32.mrf.mxu0
  %v385 = vadd.f32 %v136, %v384
  %v386 = vpop.f32.mrf.mxu0
  %v387 = vpop.f32.mrf.mxu0
  %v388 = vadd.f32 %v136, %v387
  %v389 = vpop.f32.mrf.mxu0
  %390 = vdwg.mxu0
  %391 = vmatprep.subr.bf16.mxu0 0
  %392 = vmatpush1.bf16.msra.mxu0 %v309
  %393 = vmatprep.subr.bf16.mxu0 0
  %394 = vmatpush1.bf16.msra.mxu0 %v308
  %395 = vmatprep.subr.bf16.mxu0 0
  %396 = vmatpush1.bf16.msra.mxu0 %v307
  %397 = vmatprep.subr.bf16.mxu0 0
  %398 = vmatpush1.bf16.msra.mxu0 %v306
  %399 = vmatprep.subr.bf16.mxu0 0
  %400 = vmatpush1.bf16.msra.mxu0 %v305
  %401 = vmatprep.subr.bf16.mxu0 0
  %402 = vmatpush1.bf16.msra.mxu0 %v304
  %403 = vmatprep.subr.bf16.mxu0 0
  %404 = vmatpush1.bf16.msra.mxu0 %v303
  %405 = vmatprep.subr.bf16.mxu0 0
  %406 = vmatpush1.bf16.msra.mxu0 %v302
  %407 = vmatprep.subr.bf16.mxu0 0
  %408 = vmatpush2.bf16.msra.mxu0 %v317
  %409 = vmatprep.subr.bf16.mxu0 0
  %410 = vmatpush2.bf16.msra.mxu0 %v316
  %411 = vmatprep.subr.bf16.mxu0 0
  %412 = vmatpush2.bf16.msra.mxu0 %v315
  %413 = vmatprep.subr.bf16.mxu0 0
  %414 = vmatpush2.bf16.msra.mxu0 %v314
  %415 = vmatprep.subr.bf16.mxu0 0
  %416 = vmatpush2.bf16.msra.mxu0 %v313
  %417 = vmatprep.subr.bf16.mxu0 0
  %418 = vmatpush2.bf16.msra.mxu0 %v312
  %419 = vmatprep.subr.bf16.mxu0 0
  %420 = vmatpush2.bf16.msra.mxu0 %v311
  %421 = vmatprep.subr.bf16.mxu0 0
  %422 = vmatpush2.bf16.msra.mxu0 %v310
  %423 = vmatprep.mubr.bf16.mxu0 %v153
  %424 = vmatmul.mubr.bf16.gmra.mxu0 %v152
  %v425 = vpop.f32.mrf.mxu0
  %v426 = vadd.f32 %v385, %v425
  %v427 = vpop.f32.mrf.mxu0
  %v428 = vpop.f32.mrf.mxu0
  %v429 = vadd.f32 %v388, %v428
  %v430 = vpop.f32.mrf.mxu0
  %431 = vdwg.mxu0
  %v432 = vmax.f32 %v426, 0.0
  %v433 = vmax.f32 %v429, 0.0
  %v434 = vpack.c.bf16 %v433, %v432
  %v436 = vunpack.c.l.b16 %v434
  %v437 = vunpack.c.h.b16 %v434
  %v438 = vpack.c.b16 %v436, %v436
  %v439 = vpack.c.b16 %v437, %v437
  %442 = vst [vmem:[%s53] sm:$0xf] %v438
  %443 = vst [vmem:[%s53 + $0x4] sm:$0xf] %v439
  %s444 = sadd.s32 0, 0
  %s445 = sadd.s32 %s444, 1
  %s446 = smul.u32 %s445, 16
  %p447 = scmp.gt.s32.totalorder %s446, 8
  // Predicated region
  $region18: #{tabular_model_forward.6} parent=0 // pred_check
    %p448 = pneg %p447
  $region19: #{tabular_model_forward.6} parent=0 // pred_check_branch
    %450 = sbr.rel (%p448) target = $region21
  $region20: #{tabular_model_forward.6} parent=0 // pred_region
    %s451 = smul.u32 %s444, 16
    %v452 = vlaneseq
    %v453 = vshrl.u32 %v452, 7
    %v454 = vadd.s32 %v453, 8
    %v455 = vstv %s451
    %v456 = vadd.s32 %v455, %v453
    %v457 = vadd.s32 %v455, %v454
    %vm458 = vcmp.lt.s32.totalorder %v456, 8
    %vm459 = vcmp.lt.s32.totalorder %v457, 8
    %v460 = vsel %vm458, %v432, 0.0
    %v461 = vsel %vm459, %v433, 0.0
    %v462 = vld [vmem:[%s4] sm:$0x1]
    %v463 = vadd.f32 %v460, %v461
    %v464 = vrot.slane %v463, 4
    %v465 = vadd.f32 %v463, %v464
    %v466 = vrot.slane %v465, 2
    %v467 = vadd.f32 %v465, %v466
    %v468 = vrot.slane %v467, 1
    %v469 = vadd.f32 %v467, %v468
    %v470 = vadd.f32 %v462, %v469
    %471 = vst [vmem:[%s4] sm:$0x1] %v470
    %v472 = vld [vmem:[%s5] sm:$0x1]
    %v473 = vmul.f32 %v460, %v460
    %v474 = vmul.f32 %v461, %v461
    %v475 = vadd.f32 %v473, %v474
    %v476 = vrot.slane %v475, 4
    %v477 = vadd.f32 %v475, %v476
    %v478 = vrot.slane %v477, 2
    %v479 = vadd.f32 %v477, %v478
    %v480 = vrot.slane %v479, 1
    %v481 = vadd.f32 %v479, %v480
    %v482 = vadd.f32 %v472, %v481
    %483 = vst [vmem:[%s5] sm:$0x1] %v482
  $region21: #{tabular_model_forward.6} parent=0 // pred_fallthru
    _
  %p484 = scmp.le.s32.totalorder %s446, 8
  // Predicated region
  $region22: #{tabular_model_forward.6} parent=0 // pred_check
    %p485 = pneg %p484
  $region23: #{tabular_model_forward.6} parent=0 // pred_check_branch
    %487 = sbr.rel (%p485) target = $region25
  $region24: #{tabular_model_forward.6} parent=0 // pred_region
    %v488 = vld [vmem:[%s4] sm:$0x1]
    %v489 = vadd.f32 %v432, %v433
    %v490 = vrot.slane %v489, 4
    %v491 = vadd.f32 %v489, %v490
    %v492 = vrot.slane %v491, 2
    %v493 = vadd.f32 %v491, %v492
    %v494 = vrot.slane %v493, 1
    %v495 = vadd.f32 %v493, %v494
    %v496 = vadd.f32 %v488, %v495
    %497 = vst [vmem:[%s4] sm:$0x1] %v496
    %v498 = vld [vmem:[%s5] sm:$0x1]
    %v499 = vmul.f32 %v432, %v432
    %v500 = vmul.f32 %v433, %v433
    %v501 = vadd.f32 %v499, %v500
    %v502 = vrot.slane %v501, 4
    %v503 = vadd.f32 %v501, %v502
    %v504 = vrot.slane %v503, 2
    %v505 = vadd.f32 %v503, %v504
    %v506 = vrot.slane %v505, 1
    %v507 = vadd.f32 %v505, %v506
    %v508 = vadd.f32 %v498, %v507
    %509 = vst [vmem:[%s5] sm:$0x1] %v508
  $region25: #{tabular_model_forward.6} parent=0 // pred_fallthru
    _
  %s510 = sadd.s32 0, 0
  %s511 = smul.u32 2, %s510
  %p512 = scmp.lt.s32.totalorder %s511, 1
  %s513 = scalar_select %p512, %s511, 1
  %s514 = smul.addr %s513, 4
  %s515 = scalar_lea.vmem %s3, %s514
  // Predicated region
  $region26: #{tabular_model_forward.6} parent=0 // pred_check
    _
  $region27: #{tabular_model_forward.6} parent=0 // pred_check_branch
    %517 = sbr.rel (0) target = $region29
  $region28: #{tabular_model_forward.6} parent=0 // pred_region
    %s518 = sadd.s32 0, 0
    %s519 = smul.u32 2, %s518
  $region29: #{tabular_model_forward.6} parent=0 // pred_fallthru
    _
  // Predicated region
  $region30: #{tabular_model_forward.6} parent=0 // pred_check
    _
  $region31: #{tabular_model_forward.6} parent=0 // pred_check_branch
    %521 = sbr.rel (0) target = $region33
  $region32: #{tabular_model_forward.6} parent=0 // pred_region
    _
  $region33: #{tabular_model_forward.6} parent=0 // pred_fallthru
    _
  // Predicated region
  $region34: #{tabular_model_forward.6} parent=0 // pred_check
    _
  $region35: #{tabular_model_forward.6} parent=0 // pred_check_branch
    %523 = sbr.rel (0) target = $region37
  $region36: #{tabular_model_forward.6} parent=0 // pred_region
    _
  $region37: #{tabular_model_forward.6} parent=0 // pred_fallthru
    _
  // Predicated region
  $region38: #{tabular_model_forward.6} parent=0 // pred_check
    _
  $region39: #{tabular_model_forward.6} parent=0 // pred_check_branch
    %525 = sbr.rel (0) target = $region41
  $region40: #{tabular_model_forward.6} parent=0 // pred_region
    %s526 = sadd.s32 0, 0
    %s527 = smul.u32 2, %s526
    %p528 = scmp.lt.s32.totalorder %s527, 1
    %s529 = scalar_select %p528, %s527, 1
    %s530 = smul.addr %s529, 4
    %s531 = scalar_lea.vmem %s3, %s530
  $region41: #{tabular_model_forward.6} parent=0 // pred_fallthru
    _
  // Predicated region
  $region42: #{tabular_model_forward.6} parent=0 // pred_check
    _
  $region43: #{tabular_model_forward.6} parent=0 // pred_check_branch
    %533 = sbr.rel (0) target = $region45
  $region44: #{tabular_model_forward.6} parent=0 // pred_region
    _
  $region45: #{tabular_model_forward.6} parent=0 // pred_fallthru
    _
  // Predicated region
  $region46: #{tabular_model_forward.6} parent=0 // pred_check
    _
  $region47: #{tabular_model_forward.6} parent=0 // pred_check_branch
    %535 = sbr.rel (0) target = $region49
  $region48: #{tabular_model_forward.6} parent=0 // pred_region
    _
  $region49: #{tabular_model_forward.6} parent=0 // pred_fallthru
    _

</llo_original>
